<compile_context>
chip_gen: v7x
topology: tpu7x:2x2x1
jax: 0.10.0
libtpu: 0.0.40
codegen_flags: <defaults>
</compile_context>

<pallas_src>
import math

import numpy as np

import jax
import jax.numpy as jnp
from jax.experimental import pallas as pl
from jax.experimental.pallas import tpu as pltpu


# ----------------------------------------------------------------------------
# trace-time (numpy) helpers: interpolation / shift / band matrices
# ----------------------------------------------------------------------------
def _interp_coeffs(n_in, n_out):
    """PyTorch Upsample(mode='bilinear', align_corners=True) 1-D coefficients."""
    coeffs = []
    for i in range(n_out):
        s = 0.0 if n_out == 1 else i * (n_in - 1) / (n_out - 1)
        i0 = int(math.floor(s))
        i0 = min(max(i0, 0), max(n_in - 2, 0))
        coeffs.append((i0, float(s - i0)))
    return coeffs


def _interp_matrix(n_in, n_out):
    """(n_out, n_in) matrix A with (A @ x) = 1-D bilinear resize of x."""
    m = np.zeros((n_out, n_in), np.float32)
    for i, (i0, f) in enumerate(_interp_coeffs(n_in, n_out)):
        m[i, i0] += 1.0 - f
        if i0 + 1 < n_in:          # when clamped, f == 0, so dropping is exact
            m[i, i0 + 1] += f
    return m


def _band(n, off):
    """(n, n) matrix D with D[a, b] = 1 iff a == b + off (zero elsewhere)."""
    d = np.zeros((n, n), np.float32)
    for a in range(n):
        b = a - off
        if 0 <= b < n:
            d[a, b] = 1.0
    return d


# ----------------------------------------------------------------------------
# kernel: one batch image per grid step; everything is dense 2-D MXU matmuls
# on a lane-dense (H, W*C) layout.  No scratch, no halos, no partial stores.
# ----------------------------------------------------------------------------
def up_kernel(x_ref, l1_ref, r1_ref, b1_ref, s_ref, r2_ref, b2_ref,
              r3_ref, b3_ref, o_ref):

    def banded_conv_relu(inp, l_ref, r_ref, b_ref):
        # relu( sum_{k in 0..2}  L[k] @ inp @ R[k]  +  b )
        acc = None
        for k in range(3):                       # static unroll: 3 H-taps
            t = jnp.dot(inp, r_ref[k], preferred_element_type=jnp.float32)
            t = jnp.dot(l_ref[k], t, preferred_element_type=jnp.float32)
            acc = t if acc is None else acc + t
        return jnp.maximum(acc + b_ref[...], 0.0)

    x = x_ref[...]                               # (H0, W0*Cin), lane-dense
    y1 = banded_conv_relu(x,  l1_ref, r1_ref, b1_ref)   # upsample + conv1
    y2 = banded_conv_relu(y1, s_ref,  r2_ref, b2_ref)   # conv2
    y3 = banded_conv_relu(y2, s_ref,  r3_ref, b3_ref)   # conv3
    o_ref[...] = y3                              # (Ho, Wo*Cout) dense store


# ----------------------------------------------------------------------------
# wrapper
# ----------------------------------------------------------------------------
def up_forward(x_nchw, w1, b1, w2, b2, w3, b3):
    """x_nchw: (N, Cin, H, W) float32.  Weights are HWIO (3, 3, cin, cout)."""
    N, Cin, H0, W0 = x_nchw.shape
    Ho, Wo = 2 * H0, 2 * W0
    Cmid = w1.shape[-1]
    Cout = w3.shape[-1]
    f32 = jnp.float32

    # ---- trace-time operators (tiny) ---------------------------------------
    ah = _interp_matrix(H0, Ho)                                   # (Ho, H0)
    aw = _interp_matrix(W0, Wo)                                   # (Wo, W0)
    s_np = np.stack([_band(Ho, 1 - k) for k in range(3)])         # (3, Ho, Ho)
    # W-axis interpolation acting on the flat (w*Cin + c) lane index
    bw = np.kron(aw.T, np.eye(Cin, dtype=np.float32))             # (W0*Cin, Wo*Cin)

    def right_ops(w, cin, cout):
        # banded (Wo*cin, Wo*cout) operator per H-tap k: carries the three
        # W-taps of conv weight w (HWIO) and the zero padding along W.
        ops = []
        for k in range(3):
            g = jnp.zeros((Wo * cin, Wo * cout), f32)
            for ox in (-1, 0, 1):
                g = g + jnp.kron(jnp.asarray(_band(Wo, ox)), w[k, ox + 1])
            ops.append(g)
        return jnp.stack(ops)                                     # (3, Wo*cin, Wo*cout)

    w1f, w2f, w3f = (w.astype(f32) for w in (w1, w2, w3))
    l1 = jnp.einsum('kab,bc->kac', jnp.asarray(s_np), jnp.asarray(ah))   # S[k] @ Ah
    r1 = jnp.einsum('ab,kbc->kac', jnp.asarray(bw),
                    right_ops(w1f, Cin, Cmid))                    # Bw @ G1[k]
    r2 = right_ops(w2f, Cmid, Cmid)
    r3 = right_ops(w3f, Cmid, Cout)
    s_ops = jnp.asarray(s_np)

    b1r = jnp.tile(b1.astype(f32), Wo).reshape(1, Wo * Cmid)
    b2r = jnp.tile(b2.astype(f32), Wo).reshape(1, Wo * Cmid)
    b3r = jnp.tile(b3.astype(f32), Wo).reshape(1, Wo * Cout)

    # lane-dense flat layout: (N, H, W*C)
    # TODO(synk): the NCHW->NHWC input transpose stays in the wrapper; folding
    # it into the kernel would need per-channel operator pairs and is not
    # worth it at these channel counts.
    x_flat = jnp.transpose(x_nchw, (0, 2, 3, 1)).reshape(N, H0, W0 * Cin).astype(f32)

    out_flat = pl.pallas_call(
        up_kernel,
        out_shape=jax.ShapeDtypeStruct((N, Ho, Wo * Cout), f32),
        grid_spec=pltpu.PrefetchScalarGridSpec(
            num_scalar_prefetch=0,
            grid=(N,),
            in_specs=[
                pl.BlockSpec((None, H0, W0 * Cin), lambda n: (n, 0, 0)),      # x
                pl.BlockSpec((3, Ho, H0), lambda n: (0, 0, 0)),               # L1
                pl.BlockSpec((3, W0 * Cin, Wo * Cmid), lambda n: (0, 0, 0)),  # R1
                pl.BlockSpec((1, Wo * Cmid), lambda n: (0, 0)),               # b1
                pl.BlockSpec((3, Ho, Ho), lambda n: (0, 0, 0)),               # S
                pl.BlockSpec((3, Wo * Cmid, Wo * Cmid), lambda n: (0, 0, 0)), # R2
                pl.BlockSpec((1, Wo * Cmid), lambda n: (0, 0)),               # b2
                pl.BlockSpec((3, Wo * Cmid, Wo * Cout), lambda n: (0, 0, 0)), # R3
                pl.BlockSpec((1, Wo * Cout), lambda n: (0, 0)),               # b3
            ],
            out_specs=pl.BlockSpec((None, Ho, Wo * Cout), lambda n: (n, 0, 0)),
        ),
        compiler_params=pltpu.CompilerParams(
            dimension_semantics=("parallel",)),
    )(x_flat, l1, r1, b1r, s_ops, r2, b2r, r3, b3r)

    out = out_flat.reshape(N, Ho, Wo, Cout)
    return jnp.transpose(out, (0, 3, 1, 2))      # -> (N, Cout, Ho, Wo)


# ----------------------------------------------------------------------------
# pure-JAX reference (independent path) for a correctness check
# ----------------------------------------------------------------------------
def _upsample_ref(x):  # NHWC, bilinear x2, align_corners=True
    N, H, W, C = x.shape
    ch = _interp_coeffs(H, 2 * H)
    i0 = jnp.array([c[0] for c in ch])
    fy = jnp.array([c[1] for c in ch], jnp.float32)
    xh = ((1.0 - fy)[None, :, None, None] * x[:, i0]
          + fy[None, :, None, None] * x[:, jnp.minimum(i0 + 1, H - 1)])
    cw = _interp_coeffs(W, 2 * W)
    j0 = jnp.array([c[0] for c in cw])
    fx = jnp.array([c[1] for c in cw], jnp.float32)
    return ((1.0 - fx)[None, None, :, None] * xh[:, :, j0]
            + fx[None, None, :, None] * xh[:, :, jnp.minimum(j0 + 1, W - 1)])


def _conv_relu_ref(x, w, b):  # x NHWC, w HWIO
    y = jax.lax.conv_general_dilated(
        x, w, window_strides=(1, 1), padding=((1, 1), (1, 1)),
        dimension_numbers=("NHWC", "HWIO", "NHWC"))
    return jnp.maximum(y + b, 0.0)


def up_ref(x_nchw, w1, b1, w2, b2, w3, b3):
    x = jnp.transpose(x_nchw, (0, 2, 3, 1))
    x = _upsample_ref(x)
    x = _conv_relu_ref(x, w1, b1)
    x = _conv_relu_ref(x, w2, b2)
    x = _conv_relu_ref(x, w3, b3)
    return jnp.transpose(x, (0, 3, 1, 2))


# ----------------------------------------------------------------------------
if __name__ == "__main__":
    # Up(in_channels=4, out_channels=4, bilinear=True, dilation=False)
    #   -> mid_channels = in_channels // 2 = 2, d_rate = 1
    N, Cin, H0, W0 = 2, 4, 16, 16
    Cmid, Cout = Cin // 2, 4

    key = jax.random.PRNGKey(0)
    kx, k1, k2, k3, k4, k5, k6 = jax.random.split(key, 7)

    x = jax.random.normal(kx, (N, Cin, H0, W0), dtype=jnp.float32)
    w1 = jax.random.normal(k1, (3, 3, Cin, Cmid), dtype=jnp.float32) * 0.2
    b1 = jax.random.normal(k2, (Cmid,), dtype=jnp.float32) * 0.1
    w2 = jax.random.normal(k3, (3, 3, Cmid, Cmid), dtype=jnp.float32) * 0.2
    b2 = jax.random.normal(k4, (Cmid,), dtype=jnp.float32) * 0.1
    w3 = jax.random.normal(k5, (3, 3, Cmid, Cout), dtype=jnp.float32) * 0.2
    b3 = jax.random.normal(k6, (Cout,), dtype=jnp.float32) * 0.1

    out = jax.block_until_ready(up_forward(x, w1, b1, w2, b2, w3, b3))
    ref = jax.block_until_ready(up_ref(x, w1, b1, w2, b2, w3, b3))

    assert out.shape == (N, Cout, 2 * H0, 2 * W0), out.shape
    err = float(jnp.max(jnp.abs(out - ref)))
    assert err < 3e-2, f"max abs err {err}"

    print("KERNEL_OK")
</pallas_src>

<mosaic_0001>
module attributes {stable_mosaic.version = 11 : i64} {
  func.func @up_kernel(%arg0: i32, %arg1: memref<1x16x64xf32, #tpu.memory_space<vmem>>, %arg2: memref<3x32x16xf32, #tpu.memory_space<vmem>>, %arg3: memref<3x64x64xf32, #tpu.memory_space<vmem>>, %arg4: memref<1x64xf32, #tpu.memory_space<vmem>>, %arg5: memref<3x32x32xf32, #tpu.memory_space<vmem>>, %arg6: memref<3x64x64xf32, #tpu.memory_space<vmem>>, %arg7: memref<1x64xf32, #tpu.memory_space<vmem>>, %arg8: memref<3x64x128xf32, #tpu.memory_space<vmem>>, %arg9: memref<1x128xf32, #tpu.memory_space<vmem>>, %arg10: memref<1x32x128xf32, #tpu.memory_space<vmem>>) attributes {dimension_semantics = [#tpu.dimension_semantics<parallel>], iteration_bounds = array<i64: 2>, scalar_prefetch = 0 : i64, scratch_operands = 0 : i64, tpu.core_type = #tpu.core_type<tc>, window_params = [{transform_indices = @transform_0, window_bounds = array<i64: 1, 16, 64>}, {pipeline_mode = #tpu.pipeline_mode<synchronous>, transform_indices = @transform_1, window_bounds = array<i64: 3, 32, 16>}, {pipeline_mode = #tpu.pipeline_mode<synchronous>, transform_indices = @transform_2, window_bounds = array<i64: 3, 64, 64>}, {pipeline_mode = #tpu.pipeline_mode<synchronous>, transform_indices = @transform_3, window_bounds = array<i64: 1, 64>}, {pipeline_mode = #tpu.pipeline_mode<synchronous>, transform_indices = @transform_4, window_bounds = array<i64: 3, 32, 32>}, {pipeline_mode = #tpu.pipeline_mode<synchronous>, transform_indices = @transform_5, window_bounds = array<i64: 3, 64, 64>}, {pipeline_mode = #tpu.pipeline_mode<synchronous>, transform_indices = @transform_6, window_bounds = array<i64: 1, 64>}, {pipeline_mode = #tpu.pipeline_mode<synchronous>, transform_indices = @transform_7, window_bounds = array<i64: 3, 64, 128>}, {pipeline_mode = #tpu.pipeline_mode<synchronous>, transform_indices = @transform_8, window_bounds = array<i64: 1, 128>}, {transform_indices = @transform_9, window_bounds = array<i64: 1, 32, 128>}]} {
    %c0 = arith.constant 0 : index
    %c0_0 = arith.constant 0 : index
    %c0_1 = arith.constant 0 : index
    %0 = vector.load %arg1[%c0, %c0_0, %c0_1] : memref<1x16x64xf32, #tpu.memory_space<vmem>>, vector<1x16x64xf32>
    %1 = vector.shape_cast %0 : vector<1x16x64xf32> to vector<16x64xf32>
    %c0_2 = arith.constant 0 : index
    %c0_3 = arith.constant 0 : index
    %c0_4 = arith.constant 0 : index
    %2 = vector.load %arg3[%c0_2, %c0_3, %c0_4] : memref<3x64x64xf32, #tpu.memory_space<vmem>>, vector<1x64x64xf32>
    %3 = vector.shape_cast %2 : vector<1x64x64xf32> to vector<64x64xf32>
    %cst = arith.constant dense<0.000000e+00> : vector<16x64xf32>
    %4 = tpu.matmul %1, %3, %cst {dimension_numbers = #tpu.dot_dimension_numbers<[1], [0], [0], [1], [0, 0, 1, 1], [], []>} : vector<16x64xf32>, vector<64x64xf32>, vector<16x64xf32> -> vector<16x64xf32>
    %c0_5 = arith.constant 0 : index
    %c0_6 = arith.constant 0 : index
    %c0_7 = arith.constant 0 : index
    %5 = vector.load %arg2[%c0_5, %c0_6, %c0_7] : memref<3x32x16xf32, #tpu.memory_space<vmem>>, vector<1x32x16xf32>
    %6 = vector.shape_cast %5 : vector<1x32x16xf32> to vector<32x16xf32>
    %cst_8 = arith.constant dense<0.000000e+00> : vector<32x64xf32>
    %7 = tpu.matmul %6, %4, %cst_8 {dimension_numbers = #tpu.dot_dimension_numbers<[1], [0], [0], [1], [0, 0, 1, 1], [], []>} : vector<32x16xf32>, vector<16x64xf32>, vector<32x64xf32> -> vector<32x64xf32>
    %c1 = arith.constant 1 : index
    %c0_9 = arith.constant 0 : index
    %c0_10 = arith.constant 0 : index
    %8 = vector.load %arg3[%c1, %c0_9, %c0_10] : memref<3x64x64xf32, #tpu.memory_space<vmem>>, vector<1x64x64xf32>
    %9 = vector.shape_cast %8 : vector<1x64x64xf32> to vector<64x64xf32>
    %cst_11 = arith.constant dense<0.000000e+00> : vector<16x64xf32>
    %10 = tpu.matmul %1, %9, %cst_11 {dimension_numbers = #tpu.dot_dimension_numbers<[1], [0], [0], [1], [0, 0, 1, 1], [], []>} : vector<16x64xf32>, vector<64x64xf32>, vector<16x64xf32> -> vector<16x64xf32>
    %c1_12 = arith.constant 1 : index
    %c0_13 = arith.constant 0 : index
    %c0_14 = arith.constant 0 : index
    %11 = vector.load %arg2[%c1_12, %c0_13, %c0_14] : memref<3x32x16xf32, #tpu.memory_space<vmem>>, vector<1x32x16xf32>
    %12 = vector.shape_cast %11 : vector<1x32x16xf32> to vector<32x16xf32>
    %cst_15 = arith.constant dense<0.000000e+00> : vector<32x64xf32>
    %13 = tpu.matmul %12, %10, %cst_15 {dimension_numbers = #tpu.dot_dimension_numbers<[1], [0], [0], [1], [0, 0, 1, 1], [], []>} : vector<32x16xf32>, vector<16x64xf32>, vector<32x64xf32> -> vector<32x64xf32>
    %14 = arith.addf %7, %13 : vector<32x64xf32>
    %c2 = arith.constant 2 : index
    %c0_16 = arith.constant 0 : index
    %c0_17 = arith.constant 0 : index
    %15 = vector.load %arg3[%c2, %c0_16, %c0_17] : memref<3x64x64xf32, #tpu.memory_space<vmem>>, vector<1x64x64xf32>
    %16 = vector.shape_cast %15 : vector<1x64x64xf32> to vector<64x64xf32>
    %cst_18 = arith.constant dense<0.000000e+00> : vector<16x64xf32>
    %17 = tpu.matmul %1, %16, %cst_18 {dimension_numbers = #tpu.dot_dimension_numbers<[1], [0], [0], [1], [0, 0, 1, 1], [], []>} : vector<16x64xf32>, vector<64x64xf32>, vector<16x64xf32> -> vector<16x64xf32>
    %c2_19 = arith.constant 2 : index
    %c0_20 = arith.constant 0 : index
    %c0_21 = arith.constant 0 : index
    %18 = vector.load %arg2[%c2_19, %c0_20, %c0_21] : memref<3x32x16xf32, #tpu.memory_space<vmem>>, vector<1x32x16xf32>
    %19 = vector.shape_cast %18 : vector<1x32x16xf32> to vector<32x16xf32>
    %cst_22 = arith.constant dense<0.000000e+00> : vector<32x64xf32>
    %20 = tpu.matmul %19, %17, %cst_22 {dimension_numbers = #tpu.dot_dimension_numbers<[1], [0], [0], [1], [0, 0, 1, 1], [], []>} : vector<32x16xf32>, vector<16x64xf32>, vector<32x64xf32> -> vector<32x64xf32>
    %21 = arith.addf %14, %20 : vector<32x64xf32>
    %c0_23 = arith.constant 0 : index
    %c0_24 = arith.constant 0 : index
    %22 = vector.load %arg4[%c0_23, %c0_24] : memref<1x64xf32, #tpu.memory_space<vmem>>, vector<1x64xf32>
    %23 = vector.broadcast %22 : vector<1x64xf32> to vector<32x64xf32>
    %24 = arith.addf %21, %23 : vector<32x64xf32>
    %cst_25 = arith.constant 0.000000e+00 : f32
    %25 = vector.broadcast %cst_25 : f32 to vector<32x64xf32>
    %26 = arith.maximumf %24, %25 : vector<32x64xf32>
    %c0_26 = arith.constant 0 : index
    %c0_27 = arith.constant 0 : index
    %c0_28 = arith.constant 0 : index
    %27 = vector.load %arg6[%c0_26, %c0_27, %c0_28] : memref<3x64x64xf32, #tpu.memory_space<vmem>>, vector<1x64x64xf32>
    %28 = vector.shape_cast %27 : vector<1x64x64xf32> to vector<64x64xf32>
    %cst_29 = arith.constant dense<0.000000e+00> : vector<32x64xf32>
    %29 = tpu.matmul %26, %28, %cst_29 {dimension_numbers = #tpu.dot_dimension_numbers<[1], [0], [0], [1], [0, 0, 1, 1], [], []>} : vector<32x64xf32>, vector<64x64xf32>, vector<32x64xf32> -> vector<32x64xf32>
    %c0_30 = arith.constant 0 : index
    %c0_31 = arith.constant 0 : index
    %c0_32 = arith.constant 0 : index
    %30 = vector.load %arg5[%c0_30, %c0_31, %c0_32] : memref<3x32x32xf32, #tpu.memory_space<vmem>>, vector<1x32x32xf32>
    %31 = vector.shape_cast %30 : vector<1x32x32xf32> to vector<32x32xf32>
    %cst_33 = arith.constant dense<0.000000e+00> : vector<32x64xf32>
    %32 = tpu.matmul %31, %29, %cst_33 {dimension_numbers = #tpu.dot_dimension_numbers<[1], [0], [0], [1], [0, 0, 1, 1], [], []>} : vector<32x32xf32>, vector<32x64xf32>, vector<32x64xf32> -> vector<32x64xf32>
    %c1_34 = arith.constant 1 : index
    %c0_35 = arith.constant 0 : index
    %c0_36 = arith.constant 0 : index
    %33 = vector.load %arg6[%c1_34, %c0_35, %c0_36] : memref<3x64x64xf32, #tpu.memory_space<vmem>>, vector<1x64x64xf32>
    %34 = vector.shape_cast %33 : vector<1x64x64xf32> to vector<64x64xf32>
    %cst_37 = arith.constant dense<0.000000e+00> : vector<32x64xf32>
    %35 = tpu.matmul %26, %34, %cst_37 {dimension_numbers = #tpu.dot_dimension_numbers<[1], [0], [0], [1], [0, 0, 1, 1], [], []>} : vector<32x64xf32>, vector<64x64xf32>, vector<32x64xf32> -> vector<32x64xf32>
    %c1_38 = arith.constant 1 : index
    %c0_39 = arith.constant 0 : index
    %c0_40 = arith.constant 0 : index
    %36 = vector.load %arg5[%c1_38, %c0_39, %c0_40] : memref<3x32x32xf32, #tpu.memory_space<vmem>>, vector<1x32x32xf32>
    %37 = vector.shape_cast %36 : vector<1x32x32xf32> to vector<32x32xf32>
    %cst_41 = arith.constant dense<0.000000e+00> : vector<32x64xf32>
    %38 = tpu.matmul %37, %35, %cst_41 {dimension_numbers = #tpu.dot_dimension_numbers<[1], [0], [0], [1], [0, 0, 1, 1], [], []>} : vector<32x32xf32>, vector<32x64xf32>, vector<32x64xf32> -> vector<32x64xf32>
    %39 = arith.addf %32, %38 : vector<32x64xf32>
    %c2_42 = arith.constant 2 : index
    %c0_43 = arith.constant 0 : index
    %c0_44 = arith.constant 0 : index
    %40 = vector.load %arg6[%c2_42, %c0_43, %c0_44] : memref<3x64x64xf32, #tpu.memory_space<vmem>>, vector<1x64x64xf32>
    %41 = vector.shape_cast %40 : vector<1x64x64xf32> to vector<64x64xf32>
    %cst_45 = arith.constant dense<0.000000e+00> : vector<32x64xf32>
    %42 = tpu.matmul %26, %41, %cst_45 {dimension_numbers = #tpu.dot_dimension_numbers<[1], [0], [0], [1], [0, 0, 1, 1], [], []>} : vector<32x64xf32>, vector<64x64xf32>, vector<32x64xf32> -> vector<32x64xf32>
    %c2_46 = arith.constant 2 : index
    %c0_47 = arith.constant 0 : index
    %c0_48 = arith.constant 0 : index
    %43 = vector.load %arg5[%c2_46, %c0_47, %c0_48] : memref<3x32x32xf32, #tpu.memory_space<vmem>>, vector<1x32x32xf32>
    %44 = vector.shape_cast %43 : vector<1x32x32xf32> to vector<32x32xf32>
    %cst_49 = arith.constant dense<0.000000e+00> : vector<32x64xf32>
    %45 = tpu.matmul %44, %42, %cst_49 {dimension_numbers = #tpu.dot_dimension_numbers<[1], [0], [0], [1], [0, 0, 1, 1], [], []>} : vector<32x32xf32>, vector<32x64xf32>, vector<32x64xf32> -> vector<32x64xf32>
    %46 = arith.addf %39, %45 : vector<32x64xf32>
    %c0_50 = arith.constant 0 : index
    %c0_51 = arith.constant 0 : index
    %47 = vector.load %arg7[%c0_50, %c0_51] : memref<1x64xf32, #tpu.memory_space<vmem>>, vector<1x64xf32>
    %48 = vector.broadcast %47 : vector<1x64xf32> to vector<32x64xf32>
    %49 = arith.addf %46, %48 : vector<32x64xf32>
    %cst_52 = arith.constant 0.000000e+00 : f32
    %50 = vector.broadcast %cst_52 : f32 to vector<32x64xf32>
    %51 = arith.maximumf %49, %50 : vector<32x64xf32>
    %c0_53 = arith.constant 0 : index
    %c0_54 = arith.constant 0 : index
    %c0_55 = arith.constant 0 : index
    %52 = vector.load %arg8[%c0_53, %c0_54, %c0_55] : memref<3x64x128xf32, #tpu.memory_space<vmem>>, vector<1x64x128xf32>
    %53 = vector.shape_cast %52 : vector<1x64x128xf32> to vector<64x128xf32>
    %cst_56 = arith.constant dense<0.000000e+00> : vector<32x128xf32>
    %54 = tpu.matmul %51, %53, %cst_56 {dimension_numbers = #tpu.dot_dimension_numbers<[1], [0], [0], [1], [0, 0, 1, 1], [], []>} : vector<32x64xf32>, vector<64x128xf32>, vector<32x128xf32> -> vector<32x128xf32>
    %c0_57 = arith.constant 0 : index
    %c0_58 = arith.constant 0 : index
    %c0_59 = arith.constant 0 : index
    %55 = vector.load %arg5[%c0_57, %c0_58, %c0_59] : memref<3x32x32xf32, #tpu.memory_space<vmem>>, vector<1x32x32xf32>
    %56 = vector.shape_cast %55 : vector<1x32x32xf32> to vector<32x32xf32>
    %cst_60 = arith.constant dense<0.000000e+00> : vector<32x128xf32>
    %57 = tpu.matmul %56, %54, %cst_60 {dimension_numbers = #tpu.dot_dimension_numbers<[1], [0], [0], [1], [0, 0, 1, 1], [], []>} : vector<32x32xf32>, vector<32x128xf32>, vector<32x128xf32> -> vector<32x128xf32>
    %c1_61 = arith.constant 1 : index
    %c0_62 = arith.constant 0 : index
    %c0_63 = arith.constant 0 : index
    %58 = vector.load %arg8[%c1_61, %c0_62, %c0_63] : memref<3x64x128xf32, #tpu.memory_space<vmem>>, vector<1x64x128xf32>
    %59 = vector.shape_cast %58 : vector<1x64x128xf32> to vector<64x128xf32>
    %cst_64 = arith.constant dense<0.000000e+00> : vector<32x128xf32>
    %60 = tpu.matmul %51, %59, %cst_64 {dimension_numbers = #tpu.dot_dimension_numbers<[1], [0], [0], [1], [0, 0, 1, 1], [], []>} : vector<32x64xf32>, vector<64x128xf32>, vector<32x128xf32> -> vector<32x128xf32>
    %c1_65 = arith.constant 1 : index
    %c0_66 = arith.constant 0 : index
    %c0_67 = arith.constant 0 : index
    %61 = vector.load %arg5[%c1_65, %c0_66, %c0_67] : memref<3x32x32xf32, #tpu.memory_space<vmem>>, vector<1x32x32xf32>
    %62 = vector.shape_cast %61 : vector<1x32x32xf32> to vector<32x32xf32>
    %cst_68 = arith.constant dense<0.000000e+00> : vector<32x128xf32>
    %63 = tpu.matmul %62, %60, %cst_68 {dimension_numbers = #tpu.dot_dimension_numbers<[1], [0], [0], [1], [0, 0, 1, 1], [], []>} : vector<32x32xf32>, vector<32x128xf32>, vector<32x128xf32> -> vector<32x128xf32>
    %64 = arith.addf %57, %63 : vector<32x128xf32>
    %c2_69 = arith.constant 2 : index
    %c0_70 = arith.constant 0 : index
    %c0_71 = arith.constant 0 : index
    %65 = vector.load %arg8[%c2_69, %c0_70, %c0_71] : memref<3x64x128xf32, #tpu.memory_space<vmem>>, vector<1x64x128xf32>
    %66 = vector.shape_cast %65 : vector<1x64x128xf32> to vector<64x128xf32>
    %cst_72 = arith.constant dense<0.000000e+00> : vector<32x128xf32>
    %67 = tpu.matmul %51, %66, %cst_72 {dimension_numbers = #tpu.dot_dimension_numbers<[1], [0], [0], [1], [0, 0, 1, 1], [], []>} : vector<32x64xf32>, vector<64x128xf32>, vector<32x128xf32> -> vector<32x128xf32>
    %c2_73 = arith.constant 2 : index
    %c0_74 = arith.constant 0 : index
    %c0_75 = arith.constant 0 : index
    %68 = vector.load %arg5[%c2_73, %c0_74, %c0_75] : memref<3x32x32xf32, #tpu.memory_space<vmem>>, vector<1x32x32xf32>
    %69 = vector.shape_cast %68 : vector<1x32x32xf32> to vector<32x32xf32>
    %cst_76 = arith.constant dense<0.000000e+00> : vector<32x128xf32>
    %70 = tpu.matmul %69, %67, %cst_76 {dimension_numbers = #tpu.dot_dimension_numbers<[1], [0], [0], [1], [0, 0, 1, 1], [], []>} : vector<32x32xf32>, vector<32x128xf32>, vector<32x128xf32> -> vector<32x128xf32>
    %71 = arith.addf %64, %70 : vector<32x128xf32>
    %c0_77 = arith.constant 0 : index
    %c0_78 = arith.constant 0 : index
    %72 = vector.load %arg9[%c0_77, %c0_78] : memref<1x128xf32, #tpu.memory_space<vmem>>, vector<1x128xf32>
    %73 = vector.broadcast %72 : vector<1x128xf32> to vector<32x128xf32>
    %74 = arith.addf %71, %73 : vector<32x128xf32>
    %cst_79 = arith.constant 0.000000e+00 : f32
    %75 = vector.broadcast %cst_79 : f32 to vector<32x128xf32>
    %76 = arith.maximumf %74, %75 : vector<32x128xf32>
    %c0_80 = arith.constant 0 : index
    %c0_81 = arith.constant 0 : index
    %c0_82 = arith.constant 0 : index
    %77 = vector.load %arg10[%c0_80, %c0_81, %c0_82] : memref<1x32x128xf32, #tpu.memory_space<vmem>>, vector<1x32x128xf32>
    %78 = vector.shape_cast %77 : vector<1x32x128xf32> to vector<32x128xf32>
    %79 = vector.shape_cast %76 : vector<32x128xf32> to vector<1x32x128xf32>
    tpu.vector_store %arg10[%c0_80, %c0_81, %c0_82], %79 {strides = array<i32>} : memref<1x32x128xf32, #tpu.memory_space<vmem>>, vector<1x32x128xf32>,
    return
  }
  func.func @transform_0(%arg0: i32) -> (i32, i32, i32) {
    %c0_i32 = arith.constant 0 : i32
    %c0_i32_0 = arith.constant 0 : i32
    %c0_i32_1 = arith.constant 0 : i32
    return %arg0, %c0_i32, %c0_i32_0 : i32, i32, i32
  }
  func.func @transform_1(%arg0: i32) -> (i32, i32, i32) {
    %c0_i32 = arith.constant 0 : i32
    %c0_i32_0 = arith.constant 0 : i32
    %c0_i32_1 = arith.constant 0 : i32
    %c0_i32_2 = arith.constant 0 : i32
    return %c0_i32, %c0_i32_0, %c0_i32_1 : i32, i32, i32
  }
  func.func @transform_2(%arg0: i32) -> (i32, i32, i32) {
    %c0_i32 = arith.constant 0 : i32
    %c0_i32_0 = arith.constant 0 : i32
    %c0_i32_1 = arith.constant 0 : i32
    %c0_i32_2 = arith.constant 0 : i32
    return %c0_i32, %c0_i32_0, %c0_i32_1 : i32, i32, i32
  }
  func.func @transform_3(%arg0: i32) -> (i32, i32) {
    %c0_i32 = arith.constant 0 : i32
    %c0_i32_0 = arith.constant 0 : i32
    %c0_i32_1 = arith.constant 0 : i32
    return %c0_i32, %c0_i32_0 : i32, i32
  }
  func.func @transform_4(%arg0: i32) -> (i32, i32, i32) {
    %c0_i32 = arith.constant 0 : i32
    %c0_i32_0 = arith.constant 0 : i32
    %c0_i32_1 = arith.constant 0 : i32
    %c0_i32_2 = arith.constant 0 : i32
    return %c0_i32, %c0_i32_0, %c0_i32_1 : i32, i32, i32
  }
  func.func @transform_5(%arg0: i32) -> (i32, i32, i32) {
    %c0_i32 = arith.constant 0 : i32
    %c0_i32_0 = arith.constant 0 : i32
    %c0_i32_1 = arith.constant 0 : i32
    %c0_i32_2 = arith.constant 0 : i32
    return %c0_i32, %c0_i32_0, %c0_i32_1 : i32, i32, i32
  }
  func.func @transform_6(%arg0: i32) -> (i32, i32) {
    %c0_i32 = arith.constant 0 : i32
    %c0_i32_0 = arith.constant 0 : i32
    %c0_i32_1 = arith.constant 0 : i32
    return %c0_i32, %c0_i32_0 : i32, i32
  }
  func.func @transform_7(%arg0: i32) -> (i32, i32, i32) {
    %c0_i32 = arith.constant 0 : i32
    %c0_i32_0 = arith.constant 0 : i32
    %c0_i32_1 = arith.constant 0 : i32
    %c0_i32_2 = arith.constant 0 : i32
    return %c0_i32, %c0_i32_0, %c0_i32_1 : i32, i32, i32
  }
  func.func @transform_8(%arg0: i32) -> (i32, i32) {
    %c0_i32 = arith.constant 0 : i32
    %c0_i32_0 = arith.constant 0 : i32
    %c0_i32_1 = arith.constant 0 : i32
    return %c0_i32, %c0_i32_0 : i32, i32
  }
  func.func @transform_9(%arg0: i32) -> (i32, i32, i32) {
    %c0_i32 = arith.constant 0 : i32
    %c0_i32_0 = arith.constant 0 : i32
    %c0_i32_1 = arith.constant 0 : i32
    return %arg0, %c0_i32, %c0_i32_0 : i32, i32, i32
  }
}

</mosaic_0001>

<llo_original>
// kernel: tpu_custom_call.1
$region0: #{tpu_custom_call.1}
  #allocation0 [shape = 'u32[]', space=smem, size = 0x4, offset = 0x4, fixed_abs, tag = 'smem constant byte address 0x4 - core index']
  #allocation1 [shape = 'u32[144,128]{1,0:T(1,128)}', space=vmem, size = 0x12000, scoped, tag = 'internal scratch']
  %s0 = inlined_call_operand.vmem [shape: f32[2,16,64], index: 0, kind: input, shape index: {}]
  %s1 = inlined_call_operand.vmem [shape: f32[3,32,16], index: 1, kind: input, shape index: {}]
  %s2 = inlined_call_operand.hbm [shape: f32[3,64,64], index: 2, kind: input, shape index: {}]
  %s3 = inlined_call_operand.vmem [shape: f32[1,64], index: 3, kind: input, shape index: {}]
  %s4 = inlined_call_operand.vmem [shape: f32[3,32,32], index: 4, kind: input, shape index: {}]
  %s5 = inlined_call_operand.hbm [shape: f32[3,64,64], index: 5, kind: input, shape index: {}]
  %s6 = inlined_call_operand.vmem [shape: f32[1,64], index: 6, kind: input, shape index: {}]
  %s7 = inlined_call_operand.hbm [shape: f32[3,64,128], index: 7, kind: input, shape index: {}]
  %s8 = inlined_call_operand.vmem [shape: f32[1,128], index: 8, kind: input, shape index: {}]
  %s9 = inlined_call_operand.hbm [shape: f32[2,32,128], index: 9, kind: output, shape index: {}]
  %s10 = sld [smem:[#allocation0]]
  $region81: #{tpu_custom_call.1} parent=0
    _
  %s12 = ssub.s32 1, %s10
  %s13 = scalar_select 0, %s12, %s10
  $region1: #{tpu_custom_call.1} parent=0
    #allocation2 [shape = 'u8[98304]{0}', space=vmem, size = 0x18000, scoped, tag = 'input window, operand 2, single buffered']
    #allocation3 [shape = 's32[2]{0}', space=sflag, size = 0x8, scoped, tag = 'scoped memory for tpu_custom_call.1']
    #allocation4 [shape = 's32[2]{0}', space=sflag, size = 0x8, scoped, tag = 'scoped memory for tpu_custom_call.1']
    #allocation5 [shape = 'u8[98304]{0}', space=vmem, size = 0x18000, scoped, tag = 'input window, operand 5, single buffered']
    #allocation6 [shape = 's32[1]{0}', space=sflag, size = 0x4, scoped, tag = 'scoped memory for tpu_custom_call.1']
    #allocation7 [shape = 'u8[98304]{0}', space=vmem, size = 0x18000, scoped, tag = 'input window, operand 7, single buffered']
    #allocation8 [shape = 'u8[32768]{0}', space=vmem, size = 0x8000, scoped, tag = 'output window, operand 0']
    %14 = vsyncpa [#allocation3], 0
    %15 = vsyncpa [#allocation6], 0
    %16 = vsyncpa [#allocation4], 0
    %s17 = scalar_lea.sflag [#allocation4], 1
    %18 = vsyncpa %s17, 0
    loop: start=0, step=1, limit=4
    $region2: #{tpu_custom_call.1} parent=1 // loop_pre_header
      _
    $region3: #{tpu_custom_call.1} parent=1 // loop_header
      %s20 = sphi 0, %s24
      %p21 = scmp.ge.s32.totalorder %s20, 4
      %s30 = sphi 0, %s32
      %s33 = sphi 0, %s30
      %s34 = sphi 0, %s33
      %s50 = sphi 0, %s34
      %s54 = sphi 0, %s54
      %s56 = sphi 0, %s54
      %s57 = sphi 0, %s56
      %s71 = sphi 0, %s57
      %s75 = sphi 0, %s75
      %s77 = sphi 0, %s75
      %s78 = sphi 0, %s77
      %s92 = sphi 0, %s78
      %s96 = sphi 0, %s96
      %s98 = sphi 0, %s96
      %s99 = sphi 0, %s98
      %s113 = sphi 0, %s99
      %s117 = sphi 0, %s117
      %s119 = sphi 0, %s117
      %s120 = sphi 0, %s119
      %s134 = sphi 0, %s120
      %s138 = sphi 0, %s138
      %s140 = sphi 0, %s138
      %s141 = sphi 0, %s140
      %s155 = sphi 0, %s141
      %s159 = sphi 0, %s159
      %s161 = sphi 0, %s159
      %s162 = sphi 0, %s161
      %s176 = sphi 0, %s162
      %s180 = sphi 0, %s180
      %s182 = sphi 0, %s180
      %s183 = sphi 0, %s182
      %s197 = sphi 0, %s183
      %s201 = sphi 0, %s201
      %s203 = sphi 0, %s201
      %s204 = sphi 0, %s203
      %s218 = sphi 0, %s204
      %s224 = sphi 0, %s226
      %s227 = sphi 0, %s224
      %s228 = sphi 0, %s227
      %s244 = sphi 0, %s228
    $region4: #{tpu_custom_call.1} parent=1 // loop_header_branch
      %23 = sbr.rel (%p21) target = $region8
    $region5: #{tpu_custom_call.1} parent=1 // loop_body
      %s25 = ssub.s32 %s20, 1
      %s26 = ssub.s32 %s20, 2
      %s27 = sadd.s32 %s20, 1
      %s28 = ssub.s32 %s20, %s27
      %p29 = scmp.eq.s32.totalorder %s28, 0
      %s31 = sadd.s32 %s30, 1
      %s32 = scalar_select %p29, %s30, %s31
      %p35 = pneg %p29
      %p36 = scmp.eq.s32.totalorder %s20, 1
      %p37 = por %p35, %p36
      %p38 = scmp.ne.s32.totalorder %s30, %s33
      %p39 = scmp.eq.s32.totalorder %s20, 0
      %p40 = por %p38, %p39
      %p41 = scmp.ne.s32.totalorder %s30, %s33
      %p42 = scmp.eq.s32.totalorder %s25, 1
      %p43 = por %p41, %p42
      %p44 = scmp.ne.s32.totalorder %s33, %s34
      %p45 = scmp.eq.s32.totalorder %s25, 0
      %p46 = por %p44, %p45
      %p47 = scmp.ne.s32.totalorder %s33, %s34
      %p48 = scmp.eq.s32.totalorder %s26, 1
      %p49 = por %p47, %p48
      %p51 = scmp.ne.s32.totalorder %s34, %s50
      %p52 = scmp.eq.s32.totalorder %s26, 0
      %p53 = por %p51, %p52
      %s55 = sadd.s32 %s54, 1
      %p58 = scmp.eq.s32.totalorder %s20, 1
      %p59 = scmp.ne.s32.totalorder %s54, %s56
      %p60 = scmp.eq.s32.totalorder %s20, 0
      %p61 = por %p59, %p60
      %p62 = scmp.ne.s32.totalorder %s54, %s56
      %p63 = scmp.eq.s32.totalorder %s25, 1
      %p64 = por %p62, %p63
      %p65 = scmp.ne.s32.totalorder %s56, %s57
      %p66 = scmp.eq.s32.totalorder %s25, 0
      %p67 = por %p65, %p66
      %p68 = scmp.ne.s32.totalorder %s56, %s57
      %p69 = scmp.eq.s32.totalorder %s26, 1
      %p70 = por %p68, %p69
      %p72 = scmp.ne.s32.totalorder %s57, %s71
      %p73 = scmp.eq.s32.totalorder %s26, 0
      %p74 = por %p72, %p73
      %s76 = sadd.s32 %s75, 1
      %p79 = scmp.eq.s32.totalorder %s20, 1
      %p80 = scmp.ne.s32.totalorder %s75, %s77
      %p81 = scmp.eq.s32.totalorder %s20, 0
      %p82 = por %p80, %p81
      %p83 = scmp.ne.s32.totalorder %s75, %s77
      %p84 = scmp.eq.s32.totalorder %s25, 1
      %p85 = por %p83, %p84
      %p86 = scmp.ne.s32.totalorder %s77, %s78
      %p87 = scmp.eq.s32.totalorder %s25, 0
      %p88 = por %p86, %p87
      %p89 = scmp.ne.s32.totalorder %s77, %s78
      %p90 = scmp.eq.s32.totalorder %s26, 1
      %p91 = por %p89, %p90
      %p93 = scmp.ne.s32.totalorder %s78, %s92
      %p94 = scmp.eq.s32.totalorder %s26, 0
      %p95 = por %p93, %p94
      %s97 = sadd.s32 %s96, 1
      %p100 = scmp.eq.s32.totalorder %s20, 1
      %p101 = scmp.ne.s32.totalorder %s96, %s98
      %p102 = scmp.eq.s32.totalorder %s20, 0
      %p103 = por %p101, %p102
      %p104 = scmp.ne.s32.totalorder %s96, %s98
      %p105 = scmp.eq.s32.totalorder %s25, 1
      %p106 = por %p104, %p105
      %p107 = scmp.ne.s32.totalorder %s98, %s99
      %p108 = scmp.eq.s32.totalorder %s25, 0
      %p109 = por %p107, %p108
      %p110 = scmp.ne.s32.totalorder %s98, %s99
      %p111 = scmp.eq.s32.totalorder %s26, 1
      %p112 = por %p110, %p111
      %p114 = scmp.ne.s32.totalorder %s99, %s113
      %p115 = scmp.eq.s32.totalorder %s26, 0
      %p116 = por %p114, %p115
      %s118 = sadd.s32 %s117, 1
      %p121 = scmp.eq.s32.totalorder %s20, 1
      %p122 = scmp.ne.s32.totalorder %s117, %s119
      %p123 = scmp.eq.s32.totalorder %s20, 0
      %p124 = por %p122, %p123
      %p125 = scmp.ne.s32.totalorder %s117, %s119
      %p126 = scmp.eq.s32.totalorder %s25, 1
      %p127 = por %p125, %p126
      %p128 = scmp.ne.s32.totalorder %s119, %s120
      %p129 = scmp.eq.s32.totalorder %s25, 0
      %p130 = por %p128, %p129
      %p131 = scmp.ne.s32.totalorder %s119, %s120
      %p132 = scmp.eq.s32.totalorder %s26, 1
      %p133 = por %p131, %p132
      %p135 = scmp.ne.s32.totalorder %s120, %s134
      %p136 = scmp.eq.s32.totalorder %s26, 0
      %p137 = por %p135, %p136
      %s139 = sadd.s32 %s138, 1
      %p142 = scmp.eq.s32.totalorder %s20, 1
      %p143 = scmp.ne.s32.totalorder %s138, %s140
      %p144 = scmp.eq.s32.totalorder %s20, 0
      %p145 = por %p143, %p144
      %p146 = scmp.ne.s32.totalorder %s138, %s140
      %p147 = scmp.eq.s32.totalorder %s25, 1
      %p148 = por %p146, %p147
      %p149 = scmp.ne.s32.totalorder %s140, %s141
      %p150 = scmp.eq.s32.totalorder %s25, 0
      %p151 = por %p149, %p150
      %p152 = scmp.ne.s32.totalorder %s140, %s141
      %p153 = scmp.eq.s32.totalorder %s26, 1
      %p154 = por %p152, %p153
      %p156 = scmp.ne.s32.totalorder %s141, %s155
      %p157 = scmp.eq.s32.totalorder %s26, 0
      %p158 = por %p156, %p157
      %s160 = sadd.s32 %s159, 1
      %p163 = scmp.eq.s32.totalorder %s20, 1
      %p164 = scmp.ne.s32.totalorder %s159, %s161
      %p165 = scmp.eq.s32.totalorder %s20, 0
      %p166 = por %p164, %p165
      %p167 = scmp.ne.s32.totalorder %s159, %s161
      %p168 = scmp.eq.s32.totalorder %s25, 1
      %p169 = por %p167, %p168
      %p170 = scmp.ne.s32.totalorder %s161, %s162
      %p171 = scmp.eq.s32.totalorder %s25, 0
      %p172 = por %p170, %p171
      %p173 = scmp.ne.s32.totalorder %s161, %s162
      %p174 = scmp.eq.s32.totalorder %s26, 1
      %p175 = por %p173, %p174
      %p177 = scmp.ne.s32.totalorder %s162, %s176
      %p178 = scmp.eq.s32.totalorder %s26, 0
      %p179 = por %p177, %p178
      %s181 = sadd.s32 %s180, 1
      %p184 = scmp.eq.s32.totalorder %s20, 1
      %p185 = scmp.ne.s32.totalorder %s180, %s182
      %p186 = scmp.eq.s32.totalorder %s20, 0
      %p187 = por %p185, %p186
      %p188 = scmp.ne.s32.totalorder %s180, %s182
      %p189 = scmp.eq.s32.totalorder %s25, 1
      %p190 = por %p188, %p189
      %p191 = scmp.ne.s32.totalorder %s182, %s183
      %p192 = scmp.eq.s32.totalorder %s25, 0
      %p193 = por %p191, %p192
      %p194 = scmp.ne.s32.totalorder %s182, %s183
      %p195 = scmp.eq.s32.totalorder %s26, 1
      %p196 = por %p194, %p195
      %p198 = scmp.ne.s32.totalorder %s183, %s197
      %p199 = scmp.eq.s32.totalorder %s26, 0
      %p200 = por %p198, %p199
      %s202 = sadd.s32 %s201, 1
      %p205 = scmp.eq.s32.totalorder %s20, 1
      %p206 = scmp.ne.s32.totalorder %s201, %s203
      %p207 = scmp.eq.s32.totalorder %s20, 0
      %p208 = por %p206, %p207
      %p209 = scmp.ne.s32.totalorder %s201, %s203
      %p210 = scmp.eq.s32.totalorder %s25, 1
      %p211 = por %p209, %p210
      %p212 = scmp.ne.s32.totalorder %s203, %s204
      %p213 = scmp.eq.s32.totalorder %s25, 0
      %p214 = por %p212, %p213
      %p215 = scmp.ne.s32.totalorder %s203, %s204
      %p216 = scmp.eq.s32.totalorder %s26, 1
      %p217 = por %p215, %p216
      %p219 = scmp.ne.s32.totalorder %s204, %s218
      %p220 = scmp.eq.s32.totalorder %s26, 0
      %p221 = por %p219, %p220
      %s222 = ssub.s32 %s20, %s27
      %p223 = scmp.eq.s32.totalorder %s222, 0
      %s225 = sadd.s32 %s224, 1
      %s226 = scalar_select %p223, %s224, %s225
      %p229 = pneg %p223
      %p230 = scmp.eq.s32.totalorder %s20, 1
      %p231 = por %p229, %p230
      %p232 = scmp.ne.s32.totalorder %s224, %s227
      %p233 = scmp.eq.s32.totalorder %s20, 0
      %p234 = por %p232, %p233
      %p235 = scmp.ne.s32.totalorder %s224, %s227
      %p236 = scmp.eq.s32.totalorder %s25, 1
      %p237 = por %p235, %p236
      %p238 = scmp.ne.s32.totalorder %s227, %s228
      %p239 = scmp.eq.s32.totalorder %s25, 0
      %p240 = por %p238, %p239
      %p241 = scmp.ne.s32.totalorder %s227, %s228
      %p242 = scmp.eq.s32.totalorder %s26, 1
      %p243 = por %p241, %p242
      %p245 = scmp.ne.s32.totalorder %s228, %s244
      %p246 = scmp.eq.s32.totalorder %s26, 0
      %p247 = por %p245, %p246
      %p248 = scmp.le.s32.totalorder 1, %s20
      %p249 = scmp.lt.s32.totalorder %s20, 3
      %p250 = pnand %p248, %p249
      %p251 = pneg %p250
      // Predicated region
      $region9: #{tpu_custom_call.1} parent=5 // pred_check
        _
      $region10: #{tpu_custom_call.1} parent=5 // pred_check_branch
        %253 = sbr.rel (%p250) target = $region12
      $region11: #{tpu_custom_call.1} parent=5 // pred_region
        %s254 = ssub.s32 %s20, 1
        // Predicated region
        $region13: #{tpu_custom_call.1} parent=11 // pred_check
          %p255 = pneg %p67
        $region14: #{tpu_custom_call.1} parent=11 // pred_check_branch
          %257 = sbr.rel (%p255) target = $region16
        $region15: #{tpu_custom_call.1} parent=11 // pred_region
          _
        $region16: #{tpu_custom_call.1} parent=11 // pred_fallthru
          _
        // Predicated region
        $region17: #{tpu_custom_call.1} parent=11 // pred_check
          %p258 = pneg %p88
        $region18: #{tpu_custom_call.1} parent=11 // pred_check_branch
          %260 = sbr.rel (%p258) target = $region20
        $region19: #{tpu_custom_call.1} parent=11 // pred_region
          %s262 = ssub.s32 3072, 3072
          %263 = vsyncadd [#allocation3], %s262
          %s264 = sshll.u32 [#allocation2], 4
          %s265 = int_to_ptr.vmem [resolvable:$true] %s264
          %270 = dma.hbm_to_vmem [thread:$0]  %s2, 3072, %s265, [#allocation3], 128, 128, 8
        $region20: #{tpu_custom_call.1} parent=11 // pred_fallthru
          _
        // Predicated region
        $region21: #{tpu_custom_call.1} parent=11 // pred_check
          %p271 = pneg %p109
        $region22: #{tpu_custom_call.1} parent=11 // pred_check_branch
          %273 = sbr.rel (%p271) target = $region24
        $region23: #{tpu_custom_call.1} parent=11 // pred_region
          _
        $region24: #{tpu_custom_call.1} parent=11 // pred_fallthru
          _
        // Predicated region
        $region25: #{tpu_custom_call.1} parent=11 // pred_check
          %p274 = pneg %p130
        $region26: #{tpu_custom_call.1} parent=11 // pred_check_branch
          %276 = sbr.rel (%p274) target = $region28
        $region27: #{tpu_custom_call.1} parent=11 // pred_region
          _
        $region28: #{tpu_custom_call.1} parent=11 // pred_fallthru
          _
        // Predicated region
        $region29: #{tpu_custom_call.1} parent=11 // pred_check
          %p277 = pneg %p151
        $region30: #{tpu_custom_call.1} parent=11 // pred_check_branch
          %279 = sbr.rel (%p277) target = $region32
        $region31: #{tpu_custom_call.1} parent=11 // pred_region
          %s281 = ssub.s32 3072, 3072
          %282 = vsyncadd [#allocation6], %s281
          %s283 = sshll.u32 [#allocation5], 4
          %s284 = int_to_ptr.vmem [resolvable:$true] %s283
          %289 = dma.hbm_to_vmem [thread:$0]  %s5, 3072, %s284, [#allocation6], 128, 128, 8
        $region32: #{tpu_custom_call.1} parent=11 // pred_fallthru
          _
        // Predicated region
        $region33: #{tpu_custom_call.1} parent=11 // pred_check
          %p290 = pneg %p172
        $region34: #{tpu_custom_call.1} parent=11 // pred_check_branch
          %292 = sbr.rel (%p290) target = $region36
        $region35: #{tpu_custom_call.1} parent=11 // pred_region
          _
        $region36: #{tpu_custom_call.1} parent=11 // pred_fallthru
          _
        // Predicated region
        $region37: #{tpu_custom_call.1} parent=11 // pred_check
          %p293 = pneg %p193
        $region38: #{tpu_custom_call.1} parent=11 // pred_check_branch
          %295 = sbr.rel (%p293) target = $region40
        $region39: #{tpu_custom_call.1} parent=11 // pred_region
          %s297 = ssub.s32 3072, 3072
          %298 = vsyncadd [#allocation6], %s297
          %s299 = sshll.u32 [#allocation7], 4
          %s300 = int_to_ptr.vmem [resolvable:$true] %s299
          %305 = dma.hbm_to_vmem [thread:$0]  %s7, 3072, %s300, [#allocation6], 128, 128, 8
        $region40: #{tpu_custom_call.1} parent=11 // pred_fallthru
          _
        // Predicated region
        $region41: #{tpu_custom_call.1} parent=11 // pred_check
          %p306 = pneg %p214
        $region42: #{tpu_custom_call.1} parent=11 // pred_check_branch
          %308 = sbr.rel (%p306) target = $region44
        $region43: #{tpu_custom_call.1} parent=11 // pred_region
          _
        $region44: #{tpu_custom_call.1} parent=11 // pred_fallthru
          _
      $region12: #{tpu_custom_call.1} parent=5 // pred_fallthru
        _
      %p309 = scmp.lt.s32.totalorder %s20, 2
      // Predicated region
      $region45: #{tpu_custom_call.1} parent=5 // pred_check
        %p310 = pneg %p309
      $region46: #{tpu_custom_call.1} parent=5 // pred_check_branch
        %312 = sbr.rel (%p310) target = $region48
      $region47: #{tpu_custom_call.1} parent=5 // pred_region
        // Predicated region
        $region49: #{tpu_custom_call.1} parent=47 // pred_check
          %p313 = pneg %p40
        $region50: #{tpu_custom_call.1} parent=47 // pred_check_branch
          %315 = sbr.rel (%p313) target = $region52
        $region51: #{tpu_custom_call.1} parent=47 // pred_region
          %p316 = scmp.lt.s32.totalorder %s20, 1
          %s317 = scalar_select %p316, %s20, 1
          %s318 = smul.addr %s317, 2
          %s319 = smul.addr %s318, 8
          %s320 = scalar_lea.vmem %s0, %s319
        $region52: #{tpu_custom_call.1} parent=47 // pred_fallthru
          _
      $region48: #{tpu_custom_call.1} parent=5 // pred_fallthru
        _
      %p321 = scmp.le.s32.totalorder 1, %s20
      %p322 = scmp.lt.s32.totalorder %s20, 3
      %p323 = pnand %p321, %p322
      %p324 = pneg %p323
      // Predicated region
      $region53: #{tpu_custom_call.1} parent=5 // pred_check
        _
      $region54: #{tpu_custom_call.1} parent=5 // pred_check_branch
        %326 = sbr.rel (%p323) target = $region56
      $region55: #{tpu_custom_call.1} parent=5 // pred_region
        %s327 = ssub.s32 %s20, 1
        // Predicated region
        $region57: #{tpu_custom_call.1} parent=55 // pred_check
          %p328 = pneg %p88
        $region58: #{tpu_custom_call.1} parent=55 // pred_check_branch
          %330 = sbr.rel (%p328) target = $region60
        $region59: #{tpu_custom_call.1} parent=55 // pred_region
          %331 = dma.done [#allocation3], 3072
        $region60: #{tpu_custom_call.1} parent=55 // pred_fallthru
          _
        // Predicated region
        $region61: #{tpu_custom_call.1} parent=55 // pred_check
          %p332 = pneg %p151
        $region62: #{tpu_custom_call.1} parent=55 // pred_check_branch
          %334 = sbr.rel (%p332) target = $region64
        $region63: #{tpu_custom_call.1} parent=55 // pred_region
          %335 = dma.done [#allocation6], 3072
        $region64: #{tpu_custom_call.1} parent=55 // pred_fallthru
          _
        // Predicated region
        $region65: #{tpu_custom_call.1} parent=55 // pred_check
          %p336 = pneg %p193
        $region66: #{tpu_custom_call.1} parent=55 // pred_check_branch
          %338 = sbr.rel (%p336) target = $region68
        $region67: #{tpu_custom_call.1} parent=55 // pred_region
          %339 = dma.done [#allocation6], 3072
        $region68: #{tpu_custom_call.1} parent=55 // pred_fallthru
          _
        %p340 = scmp.lt.s32.totalorder %s25, 1
        %s341 = scalar_select %p340, %s25, 1
        %s342 = smul.addr %s341, 2
        %s343 = smul.addr %s342, 8
        %s344 = scalar_lea.vmem %s0, %s343
        %p345 = pneg %p46
        %p346 = pneg %p43
        %p347 = pneg %p67
        %p348 = pneg %p64
        %p349 = pneg %p88
        %p350 = pneg %p85
        %p351 = pneg %p109
        %p352 = pneg %p106
        %p353 = pneg %p130
        %p354 = pneg %p127
        %p355 = pneg %p151
        %p356 = pneg %p148
        %p357 = pneg %p172
        %p358 = pneg %p169
        %p359 = pneg %p193
        %p360 = pneg %p190
        %p361 = pneg %p214
        %p362 = pneg %p211
        %p363 = pneg %p240
        %p364 = pneg %p237
        %s365 = sand.u32 %s227, 1
        %s366 = scalar_lea.sflag [#allocation4], %s365
        %s367 = sand.u32 %s227, 1
        %s368 = smul.addr %s367, 32
        %s369 = scalar_lea.vmem [#allocation8], %s368
        %p370 = scmp.lt.s32.totalorder %s25, 1
        %s371 = scalar_select %p370, %s25, 1
        %s372 = smul.addr %s371, 2
        %s373 = smul.addr %s372, 8
        %s374 = scalar_lea.vmem %s0, %s373
        %v375 = vld [vmem:[%s374] sm:$0xff]
        %v376 = vld [vmem:[%s374 + $0x8] sm:$0xff]
        %v377 = vld [vmem:[#allocation2] sm:$0xff]
        %v378 = vld [vmem:[#allocation2 + $0x8] sm:$0xff]
        %v379 = vld [vmem:[#allocation2 + $0x10] sm:$0xff]
        %v380 = vld [vmem:[#allocation2 + $0x18] sm:$0xff]
        %v381 = vld [vmem:[#allocation2 + $0x20] sm:$0xff]
        %v382 = vld [vmem:[#allocation2 + $0x28] sm:$0xff]
        %v383 = vld [vmem:[#allocation2 + $0x30] sm:$0xff]
        %v384 = vld [vmem:[#allocation2 + $0x38] sm:$0xff]
        %vm385 = vcmask 523264
        %v387 = vsel %vm385, %v375, 0
        %v390 = vsel %vm385, %v376, 0
        %392 = vmatprep.subr.mxu0 0.0
        %393 = vmatpush1.msra.mxu0 %v377
        %394 = vmatprep.subr.mxu0 0.0
        %395 = vmatpush1.msra.mxu0 %v378
        %396 = vmatprep.subr.mxu0 0.0
        %397 = vmatpush1.msra.mxu0 %v379
        %398 = vmatprep.subr.mxu0 0.0
        %399 = vmatpush1.msra.mxu0 %v380
        %400 = vmatprep.subr.mxu0 0.0
        %401 = vmatpush1.msra.mxu0 %v381
        %402 = vmatprep.subr.mxu0 0.0
        %403 = vmatpush1.msra.mxu0 %v382
        %404 = vmatprep.subr.mxu0 0.0
        %405 = vmatpush1.msra.mxu0 %v383
        %406 = vmatprep.subr.mxu0 0.0
        %407 = vmatpush1.msra.mxu0 %v384
        %408 = vmatprep.subr.mxu0 0.0
        %409 = vmatpush1.msra.mxu0 0.0
        %410 = vmatprep.subr.mxu0 0.0
        %411 = vmatpush1.msra.mxu0 0.0
        %412 = vmatprep.subr.mxu0 0.0
        %413 = vmatpush1.msra.mxu0 0.0
        %414 = vmatprep.subr.mxu0 0.0
        %415 = vmatpush1.msra.mxu0 0.0
        %416 = vmatprep.subr.mxu0 0.0
        %417 = vmatpush1.msra.mxu0 0.0
        %418 = vmatprep.subr.mxu0 0.0
        %419 = vmatpush1.msra.mxu0 0.0
        %420 = vmatprep.subr.mxu0 0.0
        %421 = vmatpush1.msra.mxu0 0.0
        %422 = vmatprep.subr.mxu0 0.0
        %423 = vmatpush1.msra.mxu0 0.0
        %424 = vmatprep.subr.mxu0 0.0
        %425 = vmatpush1.msra.mxu0 0.0
        %426 = vmatprep.subr.mxu0 0.0
        %427 = vmatpush1.msra.mxu0 0.0
        %428 = vmatprep.subr.mxu0 0.0
        %429 = vmatpush1.msra.mxu0 0.0
        %430 = vmatprep.subr.mxu0 0.0
        %431 = vmatpush1.msra.mxu0 0.0
        %432 = vmatprep.subr.mxu0 0.0
        %433 = vmatpush1.msra.mxu0 0.0
        %434 = vmatprep.subr.mxu0 0.0
        %435 = vmatpush1.msra.mxu0 0.0
        %436 = vmatprep.subr.mxu0 0.0
        %437 = vmatpush1.msra.mxu0 0.0
        %438 = vmatprep.subr.mxu0 0.0
        %439 = vmatpush1.msra.mxu0 0.0
        %440 = vmatprep.subr.mxu0 0.0
        %441 = vmatpush1.msra.mxu0 0.0
        %442 = vmatprep.subr.mxu0 0.0
        %443 = vmatpush1.msra.mxu0 0.0
        %444 = vmatprep.subr.mxu0 0.0
        %445 = vmatpush1.msra.mxu0 0.0
        %446 = vmatprep.subr.mxu0 0.0
        %447 = vmatpush1.msra.mxu0 0.0
        %448 = vmatprep.subr.mxu0 0.0
        %449 = vmatpush1.msra.mxu0 0.0
        %450 = vmatprep.subr.mxu0 0.0
        %451 = vmatpush1.msra.mxu0 0.0
        %452 = vmatprep.subr.mxu0 0.0
        %453 = vmatpush1.msra.mxu0 0.0
        %454 = vmatprep.subr.mxu0 0.0
        %455 = vmatpush1.msra.mxu0 0.0
        %456 = vmatprep.mubr.f32.mxu0 0.0
        %457 = vmatmul.mubr.f32.gmra.mrb[0].mxu0 %v387
        %v458 = vpop.f32.mrb[0].mxu0
        %v459 = vadd.f32 0.0, %v458
        %v460 = vpop.f32.mrb[0].mxu0
        %461 = vmatprep.mubr.f32.mxu0 0.0
        %462 = vmatmul.mubr.f32.gmra.mrb[0].mxu0 %v390
        %v463 = vpop.f32.mrb[0].mxu0
        %v464 = vadd.f32 0.0, %v463
        %v465 = vpop.f32.mrb[0].mxu0
        %466 = vdwg.mxu0
        %v467 = vld [vmem:[%s1] sm:$0xff]
        %v468 = vld [vmem:[%s1 + $0x8] sm:$0xff]
        %v469 = vld [vmem:[%s1 + $0x10] sm:$0xff]
        %v470 = vld [vmem:[%s1 + $0x18] sm:$0xff]
        %s471 = scalar_lea.vmem [#allocation2], 64
        %v472 = vld [vmem:[%s471] sm:$0xff]
        %v473 = vld [vmem:[%s471 + $0x8] sm:$0xff]
        %v474 = vld [vmem:[%s471 + $0x10] sm:$0xff]
        %v475 = vld [vmem:[%s471 + $0x18] sm:$0xff]
        %v476 = vld [vmem:[%s471 + $0x20] sm:$0xff]
        %v477 = vld [vmem:[%s471 + $0x28] sm:$0xff]
        %v478 = vld [vmem:[%s471 + $0x30] sm:$0xff]
        %v479 = vld [vmem:[%s471 + $0x38] sm:$0xff]
        %480 = vmatprep.subr.mxu0 0.0
        %481 = vmatpush1.msra.mxu0 %v472
        %482 = vmatprep.subr.mxu0 0.0
        %483 = vmatpush1.msra.mxu0 %v473
        %484 = vmatprep.subr.mxu0 0.0
        %485 = vmatpush1.msra.mxu0 %v474
        %486 = vmatprep.subr.mxu0 0.0
        %487 = vmatpush1.msra.mxu0 %v475
        %488 = vmatprep.subr.mxu0 0.0
        %489 = vmatpush1.msra.mxu0 %v476
        %490 = vmatprep.subr.mxu0 0.0
        %491 = vmatpush1.msra.mxu0 %v477
        %492 = vmatprep.subr.mxu0 0.0
        %493 = vmatpush1.msra.mxu0 %v478
        %494 = vmatprep.subr.mxu0 0.0
        %495 = vmatpush1.msra.mxu0 %v479
        %496 = vmatprep.subr.mxu0 0.0
        %497 = vmatpush1.msra.mxu0 0.0
        %498 = vmatprep.subr.mxu0 0.0
        %499 = vmatpush1.msra.mxu0 0.0
        %500 = vmatprep.subr.mxu0 0.0
        %501 = vmatpush1.msra.mxu0 0.0
        %502 = vmatprep.subr.mxu0 0.0
        %503 = vmatpush1.msra.mxu0 0.0
        %504 = vmatprep.subr.mxu0 0.0
        %505 = vmatpush1.msra.mxu0 0.0
        %506 = vmatprep.subr.mxu0 0.0
        %507 = vmatpush1.msra.mxu0 0.0
        %508 = vmatprep.subr.mxu0 0.0
        %509 = vmatpush1.msra.mxu0 0.0
        %510 = vmatprep.subr.mxu0 0.0
        %511 = vmatpush1.msra.mxu0 0.0
        %512 = vmatprep.subr.mxu0 0.0
        %513 = vmatpush1.msra.mxu0 0.0
        %514 = vmatprep.subr.mxu0 0.0
        %515 = vmatpush1.msra.mxu0 0.0
        %516 = vmatprep.subr.mxu0 0.0
        %517 = vmatpush1.msra.mxu0 0.0
        %518 = vmatprep.subr.mxu0 0.0
        %519 = vmatpush1.msra.mxu0 0.0
        %520 = vmatprep.subr.mxu0 0.0
        %521 = vmatpush1.msra.mxu0 0.0
        %522 = vmatprep.subr.mxu0 0.0
        %523 = vmatpush1.msra.mxu0 0.0
        %524 = vmatprep.subr.mxu0 0.0
        %525 = vmatpush1.msra.mxu0 0.0
        %526 = vmatprep.subr.mxu0 0.0
        %527 = vmatpush1.msra.mxu0 0.0
        %528 = vmatprep.subr.mxu0 0.0
        %529 = vmatpush1.msra.mxu0 0.0
        %530 = vmatprep.subr.mxu0 0.0
        %531 = vmatpush1.msra.mxu0 0.0
        %532 = vmatprep.subr.mxu0 0.0
        %533 = vmatpush1.msra.mxu0 0.0
        %534 = vmatprep.subr.mxu0 0.0
        %535 = vmatpush1.msra.mxu0 0.0
        %536 = vmatprep.subr.mxu0 0.0
        %537 = vmatpush1.msra.mxu0 0.0
        %538 = vmatprep.subr.mxu0 0.0
        %539 = vmatpush1.msra.mxu0 0.0
        %540 = vmatprep.subr.mxu0 0.0
        %541 = vmatpush1.msra.mxu0 0.0
        %542 = vmatprep.subr.mxu0 0.0
        %543 = vmatpush1.msra.mxu0 0.0
        %544 = vmatprep.mubr.f32.mxu0 0.0
        %545 = vmatmul.mubr.f32.gmra.mrb[0].mxu0 %v387
        %v546 = vpop.f32.mrb[0].mxu0
        %v547 = vadd.f32 0.0, %v546
        %v548 = vpop.f32.mrb[0].mxu0
        %549 = vmatprep.mubr.f32.mxu0 0.0
        %550 = vmatmul.mubr.f32.gmra.mrb[0].mxu0 %v390
        %v551 = vpop.f32.mrb[0].mxu0
        %v552 = vadd.f32 0.0, %v551
        %v553 = vpop.f32.mrb[0].mxu0
        %554 = vdwg.mxu0
        %s555 = scalar_lea.vmem %s1, 32
        %v556 = vld [vmem:[%s555] sm:$0xff]
        %v557 = vld [vmem:[%s555 + $0x8] sm:$0xff]
        %v558 = vld [vmem:[%s555 + $0x10] sm:$0xff]
        %v559 = vld [vmem:[%s555 + $0x18] sm:$0xff]
        %vm560 = vcmask 130048
        %v562 = vsel %vm560, %v556, 0
        %v565 = vsel %vm560, %v557, 0
        %v568 = vsel %vm560, %v558, 0
        %v571 = vsel %vm560, %v559, 0
        %573 = vmatprep.subr.mxu0 0.0
        %574 = vmatpush1.msra.mxu0 %v547
        %575 = vmatprep.subr.mxu0 0.0
        %576 = vmatpush1.msra.mxu0 %v552
        %577 = vmatprep.subr.mxu0 0.0
        %578 = vmatpush1.msra.mxu0 0.0
        %579 = vmatprep.subr.mxu0 0.0
        %580 = vmatpush1.msra.mxu0 0.0
        %581 = vmatprep.subr.mxu0 0.0
        %582 = vmatpush1.msra.mxu0 0.0
        %583 = vmatprep.subr.mxu0 0.0
        %584 = vmatpush1.msra.mxu0 0.0
        %585 = vmatprep.subr.mxu0 0.0
        %586 = vmatpush1.msra.mxu0 0.0
        %587 = vmatprep.subr.mxu0 0.0
        %588 = vmatpush1.msra.mxu0 0.0
        %589 = vmatprep.subr.mxu0 0.0
        %590 = vmatpush1.msra.mxu0 0.0
        %591 = vmatprep.subr.mxu0 0.0
        %592 = vmatpush1.msra.mxu0 0.0
        %593 = vmatprep.subr.mxu0 0.0
        %594 = vmatpush1.msra.mxu0 0.0
        %595 = vmatprep.subr.mxu0 0.0
        %596 = vmatpush1.msra.mxu0 0.0
        %597 = vmatprep.subr.mxu0 0.0
        %598 = vmatpush1.msra.mxu0 0.0
        %599 = vmatprep.subr.mxu0 0.0
        %600 = vmatpush1.msra.mxu0 0.0
        %601 = vmatprep.subr.mxu0 0.0
        %602 = vmatpush1.msra.mxu0 0.0
        %603 = vmatprep.subr.mxu0 0.0
        %604 = vmatpush1.msra.mxu0 0.0
        %605 = vmatprep.subr.mxu0 0.0
        %606 = vmatpush1.msra.mxu0 0.0
        %607 = vmatprep.subr.mxu0 0.0
        %608 = vmatpush1.msra.mxu0 0.0
        %609 = vmatprep.subr.mxu0 0.0
        %610 = vmatpush1.msra.mxu0 0.0
        %611 = vmatprep.subr.mxu0 0.0
        %612 = vmatpush1.msra.mxu0 0.0
        %613 = vmatprep.subr.mxu0 0.0
        %614 = vmatpush1.msra.mxu0 0.0
        %615 = vmatprep.subr.mxu0 0.0
        %616 = vmatpush1.msra.mxu0 0.0
        %617 = vmatprep.subr.mxu0 0.0
        %618 = vmatpush1.msra.mxu0 0.0
        %619 = vmatprep.subr.mxu0 0.0
        %620 = vmatpush1.msra.mxu0 0.0
        %621 = vmatprep.subr.mxu0 0.0
        %622 = vmatpush1.msra.mxu0 0.0
        %623 = vmatprep.subr.mxu0 0.0
        %624 = vmatpush1.msra.mxu0 0.0
        %625 = vmatprep.subr.mxu0 0.0
        %626 = vmatpush1.msra.mxu0 0.0
        %627 = vmatprep.subr.mxu0 0.0
        %628 = vmatpush1.msra.mxu0 0.0
        %629 = vmatprep.subr.mxu0 0.0
        %630 = vmatpush1.msra.mxu0 0.0
        %631 = vmatprep.subr.mxu0 0.0
        %632 = vmatpush1.msra.mxu0 0.0
        %633 = vmatprep.subr.mxu0 0.0
        %634 = vmatpush1.msra.mxu0 0.0
        %635 = vmatprep.subr.mxu0 0.0
        %636 = vmatpush1.msra.mxu0 0.0
        %637 = vmatprep.mubr.f32.mxu0 0.0
        %638 = vmatmul.mubr.f32.gmra.mrb[0].mxu0 %v562
        %v639 = vpop.f32.mrb[0].mxu0
        %v640 = vadd.f32 0.0, %v639
        %v641 = vpop.f32.mrb[0].mxu0
        %642 = vmatprep.mubr.f32.mxu0 0.0
        %643 = vmatmul.mubr.f32.gmra.mrb[0].mxu0 %v565
        %v644 = vpop.f32.mrb[0].mxu0
        %v645 = vadd.f32 0.0, %v644
        %v646 = vpop.f32.mrb[0].mxu0
        %647 = vmatprep.mubr.f32.mxu0 0.0
        %648 = vmatmul.mubr.f32.gmra.mrb[0].mxu0 %v568
        %v649 = vpop.f32.mrb[0].mxu0
        %v650 = vadd.f32 0.0, %v649
        %v651 = vpop.f32.mrb[0].mxu0
        %652 = vmatprep.mubr.f32.mxu0 0.0
        %653 = vmatmul.mubr.f32.gmra.mrb[0].mxu0 %v571
        %v654 = vpop.f32.mrb[0].mxu0
        %v655 = vadd.f32 0.0, %v654
        %v656 = vpop.f32.mrb[0].mxu0
        %657 = vdwg.mxu0
        %v659 = vsel %vm560, %v467, 0
        %v662 = vsel %vm560, %v468, 0
        %v665 = vsel %vm560, %v469, 0
        %v668 = vsel %vm560, %v470, 0
        %670 = vmatprep.subr.mxu0 0.0
        %671 = vmatpush1.msra.mxu0 %v459
        %672 = vmatprep.subr.mxu0 0.0
        %673 = vmatpush1.msra.mxu0 %v464
        %674 = vmatprep.subr.mxu0 0.0
        %675 = vmatpush1.msra.mxu0 0.0
        %676 = vmatprep.subr.mxu0 0.0
        %677 = vmatpush1.msra.mxu0 0.0
        %678 = vmatprep.subr.mxu0 0.0
        %679 = vmatpush1.msra.mxu0 0.0
        %680 = vmatprep.subr.mxu0 0.0
        %681 = vmatpush1.msra.mxu0 0.0
        %682 = vmatprep.subr.mxu0 0.0
        %683 = vmatpush1.msra.mxu0 0.0
        %684 = vmatprep.subr.mxu0 0.0
        %685 = vmatpush1.msra.mxu0 0.0
        %686 = vmatprep.subr.mxu0 0.0
        %687 = vmatpush1.msra.mxu0 0.0
        %688 = vmatprep.subr.mxu0 0.0
        %689 = vmatpush1.msra.mxu0 0.0
        %690 = vmatprep.subr.mxu0 0.0
        %691 = vmatpush1.msra.mxu0 0.0
        %692 = vmatprep.subr.mxu0 0.0
        %693 = vmatpush1.msra.mxu0 0.0
        %694 = vmatprep.subr.mxu0 0.0
        %695 = vmatpush1.msra.mxu0 0.0
        %696 = vmatprep.subr.mxu0 0.0
        %697 = vmatpush1.msra.mxu0 0.0
        %698 = vmatprep.subr.mxu0 0.0
        %699 = vmatpush1.msra.mxu0 0.0
        %700 = vmatprep.subr.mxu0 0.0
        %701 = vmatpush1.msra.mxu0 0.0
        %702 = vmatprep.subr.mxu0 0.0
        %703 = vmatpush1.msra.mxu0 0.0
        %704 = vmatprep.subr.mxu0 0.0
        %705 = vmatpush1.msra.mxu0 0.0
        %706 = vmatprep.subr.mxu0 0.0
        %707 = vmatpush1.msra.mxu0 0.0
        %708 = vmatprep.subr.mxu0 0.0
        %709 = vmatpush1.msra.mxu0 0.0
        %710 = vmatprep.subr.mxu0 0.0
        %711 = vmatpush1.msra.mxu0 0.0
        %712 = vmatprep.subr.mxu0 0.0
        %713 = vmatpush1.msra.mxu0 0.0
        %714 = vmatprep.subr.mxu0 0.0
        %715 = vmatpush1.msra.mxu0 0.0
        %716 = vmatprep.subr.mxu0 0.0
        %717 = vmatpush1.msra.mxu0 0.0
        %718 = vmatprep.subr.mxu0 0.0
        %719 = vmatpush1.msra.mxu0 0.0
        %720 = vmatprep.subr.mxu0 0.0
        %721 = vmatpush1.msra.mxu0 0.0
        %722 = vmatprep.subr.mxu0 0.0
        %723 = vmatpush1.msra.mxu0 0.0
        %724 = vmatprep.subr.mxu0 0.0
        %725 = vmatpush1.msra.mxu0 0.0
        %726 = vmatprep.subr.mxu0 0.0
        %727 = vmatpush1.msra.mxu0 0.0
        %728 = vmatprep.subr.mxu0 0.0
        %729 = vmatpush1.msra.mxu0 0.0
        %730 = vmatprep.subr.mxu0 0.0
        %731 = vmatpush1.msra.mxu0 0.0
        %732 = vmatprep.subr.mxu0 0.0
        %733 = vmatpush1.msra.mxu0 0.0
        %734 = vmatprep.mubr.f32.mxu0 0.0
        %735 = vmatmul.mubr.f32.gmra.mrb[0].mxu0 %v659
        %v736 = vpop.f32.mrb[0].mxu0
        %v737 = vadd.f32 %v640, %v736
        %v738 = vpop.f32.mrb[0].mxu0
        %739 = vmatprep.mubr.f32.mxu0 0.0
        %740 = vmatmul.mubr.f32.gmra.mrb[0].mxu0 %v662
        %v741 = vpop.f32.mrb[0].mxu0
        %v742 = vadd.f32 %v645, %v741
        %v743 = vpop.f32.mrb[0].mxu0
        %744 = vmatprep.mubr.f32.mxu0 0.0
        %745 = vmatmul.mubr.f32.gmra.mrb[0].mxu0 %v665
        %v746 = vpop.f32.mrb[0].mxu0
        %v747 = vadd.f32 %v650, %v746
        %v748 = vpop.f32.mrb[0].mxu0
        %749 = vmatprep.mubr.f32.mxu0 0.0
        %750 = vmatmul.mubr.f32.gmra.mrb[0].mxu0 %v668
        %v751 = vpop.f32.mrb[0].mxu0
        %v752 = vadd.f32 %v655, %v751
        %v753 = vpop.f32.mrb[0].mxu0
        %754 = vdwg.mxu0
        %s755 = scalar_lea.vmem [#allocation2], 128
        %v756 = vld [vmem:[%s755] sm:$0xff]
        %v757 = vld [vmem:[%s755 + $0x8] sm:$0xff]
        %v758 = vld [vmem:[%s755 + $0x10] sm:$0xff]
        %v759 = vld [vmem:[%s755 + $0x18] sm:$0xff]
        %v760 = vld [vmem:[%s755 + $0x20] sm:$0xff]
        %v761 = vld [vmem:[%s755 + $0x28] sm:$0xff]
        %v762 = vld [vmem:[%s755 + $0x30] sm:$0xff]
        %v763 = vld [vmem:[%s755 + $0x38] sm:$0xff]
        %764 = vmatprep.subr.mxu0 0.0
        %765 = vmatpush1.msra.mxu0 %v756
        %766 = vmatprep.subr.mxu0 0.0
        %767 = vmatpush1.msra.mxu0 %v757
        %768 = vmatprep.subr.mxu0 0.0
        %769 = vmatpush1.msra.mxu0 %v758
        %770 = vmatprep.subr.mxu0 0.0
        %771 = vmatpush1.msra.mxu0 %v759
        %772 = vmatprep.subr.mxu0 0.0
        %773 = vmatpush1.msra.mxu0 %v760
        %774 = vmatprep.subr.mxu0 0.0
        %775 = vmatpush1.msra.mxu0 %v761
        %776 = vmatprep.subr.mxu0 0.0
        %777 = vmatpush1.msra.mxu0 %v762
        %778 = vmatprep.subr.mxu0 0.0
        %779 = vmatpush1.msra.mxu0 %v763
        %780 = vmatprep.subr.mxu0 0.0
        %781 = vmatpush1.msra.mxu0 0.0
        %782 = vmatprep.subr.mxu0 0.0
        %783 = vmatpush1.msra.mxu0 0.0
        %784 = vmatprep.subr.mxu0 0.0
        %785 = vmatpush1.msra.mxu0 0.0
        %786 = vmatprep.subr.mxu0 0.0
        %787 = vmatpush1.msra.mxu0 0.0
        %788 = vmatprep.subr.mxu0 0.0
        %789 = vmatpush1.msra.mxu0 0.0
        %790 = vmatprep.subr.mxu0 0.0
        %791 = vmatpush1.msra.mxu0 0.0
        %792 = vmatprep.subr.mxu0 0.0
        %793 = vmatpush1.msra.mxu0 0.0
        %794 = vmatprep.subr.mxu0 0.0
        %795 = vmatpush1.msra.mxu0 0.0
        %796 = vmatprep.subr.mxu0 0.0
        %797 = vmatpush1.msra.mxu0 0.0
        %798 = vmatprep.subr.mxu0 0.0
        %799 = vmatpush1.msra.mxu0 0.0
        %800 = vmatprep.subr.mxu0 0.0
        %801 = vmatpush1.msra.mxu0 0.0
        %802 = vmatprep.subr.mxu0 0.0
        %803 = vmatpush1.msra.mxu0 0.0
        %804 = vmatprep.subr.mxu0 0.0
        %805 = vmatpush1.msra.mxu0 0.0
        %806 = vmatprep.subr.mxu0 0.0
        %807 = vmatpush1.msra.mxu0 0.0
        %808 = vmatprep.subr.mxu0 0.0
        %809 = vmatpush1.msra.mxu0 0.0
        %810 = vmatprep.subr.mxu0 0.0
        %811 = vmatpush1.msra.mxu0 0.0
        %812 = vmatprep.subr.mxu0 0.0
        %813 = vmatpush1.msra.mxu0 0.0
        %814 = vmatprep.subr.mxu0 0.0
        %815 = vmatpush1.msra.mxu0 0.0
        %816 = vmatprep.subr.mxu0 0.0
        %817 = vmatpush1.msra.mxu0 0.0
        %818 = vmatprep.subr.mxu0 0.0
        %819 = vmatpush1.msra.mxu0 0.0
        %820 = vmatprep.subr.mxu0 0.0
        %821 = vmatpush1.msra.mxu0 0.0
        %822 = vmatprep.subr.mxu0 0.0
        %823 = vmatpush1.msra.mxu0 0.0
        %824 = vmatprep.subr.mxu0 0.0
        %825 = vmatpush1.msra.mxu0 0.0
        %826 = vmatprep.subr.mxu0 0.0
        %827 = vmatpush1.msra.mxu0 0.0
        %828 = vmatprep.mubr.f32.mxu0 0.0
        %829 = vmatmul.mubr.f32.gmra.mrb[0].mxu0 %v387
        %v830 = vpop.f32.mrb[0].mxu0
        %v831 = vadd.f32 0.0, %v830
        %v832 = vpop.f32.mrb[0].mxu0
        %833 = vmatprep.mubr.f32.mxu0 0.0
        %834 = vmatmul.mubr.f32.gmra.mrb[0].mxu0 %v390
        %v835 = vpop.f32.mrb[0].mxu0
        %v836 = vadd.f32 0.0, %v835
        %v837 = vpop.f32.mrb[0].mxu0
        %838 = vdwg.mxu0
        %s839 = scalar_lea.vmem %s1, 64
        %v840 = vld [vmem:[%s839] sm:$0xff]
        %v841 = vld [vmem:[%s839 + $0x8] sm:$0xff]
        %v842 = vld [vmem:[%s839 + $0x10] sm:$0xff]
        %v843 = vld [vmem:[%s839 + $0x18] sm:$0xff]
        %v845 = vsel %vm560, %v840, 0
        %v848 = vsel %vm560, %v841, 0
        %v851 = vsel %vm560, %v842, 0
        %v854 = vsel %vm560, %v843, 0
        %856 = vmatprep.subr.mxu0 0.0
        %857 = vmatpush1.msra.mxu0 %v831
        %858 = vmatprep.subr.mxu0 0.0
        %859 = vmatpush1.msra.mxu0 %v836
        %860 = vmatprep.subr.mxu0 0.0
        %861 = vmatpush1.msra.mxu0 0.0
        %862 = vmatprep.subr.mxu0 0.0
        %863 = vmatpush1.msra.mxu0 0.0
        %864 = vmatprep.subr.mxu0 0.0
        %865 = vmatpush1.msra.mxu0 0.0
        %866 = vmatprep.subr.mxu0 0.0
        %867 = vmatpush1.msra.mxu0 0.0
        %868 = vmatprep.subr.mxu0 0.0
        %869 = vmatpush1.msra.mxu0 0.0
        %870 = vmatprep.subr.mxu0 0.0
        %871 = vmatpush1.msra.mxu0 0.0
        %872 = vmatprep.subr.mxu0 0.0
        %873 = vmatpush1.msra.mxu0 0.0
        %874 = vmatprep.subr.mxu0 0.0
        %875 = vmatpush1.msra.mxu0 0.0
        %876 = vmatprep.subr.mxu0 0.0
        %877 = vmatpush1.msra.mxu0 0.0
        %878 = vmatprep.subr.mxu0 0.0
        %879 = vmatpush1.msra.mxu0 0.0
        %880 = vmatprep.subr.mxu0 0.0
        %881 = vmatpush1.msra.mxu0 0.0
        %882 = vmatprep.subr.mxu0 0.0
        %883 = vmatpush1.msra.mxu0 0.0
        %884 = vmatprep.subr.mxu0 0.0
        %885 = vmatpush1.msra.mxu0 0.0
        %886 = vmatprep.subr.mxu0 0.0
        %887 = vmatpush1.msra.mxu0 0.0
        %888 = vmatprep.subr.mxu0 0.0
        %889 = vmatpush1.msra.mxu0 0.0
        %890 = vmatprep.subr.mxu0 0.0
        %891 = vmatpush1.msra.mxu0 0.0
        %892 = vmatprep.subr.mxu0 0.0
        %893 = vmatpush1.msra.mxu0 0.0
        %894 = vmatprep.subr.mxu0 0.0
        %895 = vmatpush1.msra.mxu0 0.0
        %896 = vmatprep.subr.mxu0 0.0
        %897 = vmatpush1.msra.mxu0 0.0
        %898 = vmatprep.subr.mxu0 0.0
        %899 = vmatpush1.msra.mxu0 0.0
        %900 = vmatprep.subr.mxu0 0.0
        %901 = vmatpush1.msra.mxu0 0.0
        %902 = vmatprep.subr.mxu0 0.0
        %903 = vmatpush1.msra.mxu0 0.0
        %904 = vmatprep.subr.mxu0 0.0
        %905 = vmatpush1.msra.mxu0 0.0
        %906 = vmatprep.subr.mxu0 0.0
        %907 = vmatpush1.msra.mxu0 0.0
        %908 = vmatprep.subr.mxu0 0.0
        %909 = vmatpush1.msra.mxu0 0.0
        %910 = vmatprep.subr.mxu0 0.0
        %911 = vmatpush1.msra.mxu0 0.0
        %912 = vmatprep.subr.mxu0 0.0
        %913 = vmatpush1.msra.mxu0 0.0
        %914 = vmatprep.subr.mxu0 0.0
        %915 = vmatpush1.msra.mxu0 0.0
        %916 = vmatprep.subr.mxu0 0.0
        %917 = vmatpush1.msra.mxu0 0.0
        %918 = vmatprep.subr.mxu0 0.0
        %919 = vmatpush1.msra.mxu0 0.0
        %920 = vmatprep.mubr.f32.mxu0 0.0
        %921 = vmatmul.mubr.f32.gmra.mrb[0].mxu0 %v845
        %v922 = vpop.f32.mrb[0].mxu0
        %v923 = vadd.f32 0.0, %v922
        %v924 = vpop.f32.mrb[0].mxu0
        %925 = vmatprep.mubr.f32.mxu0 0.0
        %926 = vmatmul.mubr.f32.gmra.mrb[0].mxu0 %v848
        %v927 = vpop.f32.mrb[0].mxu0
        %v928 = vadd.f32 0.0, %v927
        %v929 = vpop.f32.mrb[0].mxu0
        %930 = vmatprep.mubr.f32.mxu0 0.0
        %931 = vmatmul.mubr.f32.gmra.mrb[0].mxu0 %v851
        %v932 = vpop.f32.mrb[0].mxu0
        %v933 = vadd.f32 0.0, %v932
        %v934 = vpop.f32.mrb[0].mxu0
        %935 = vmatprep.mubr.f32.mxu0 0.0
        %936 = vmatmul.mubr.f32.gmra.mrb[0].mxu0 %v854
        %v937 = vpop.f32.mrb[0].mxu0
        %v938 = vadd.f32 0.0, %v937
        %v939 = vpop.f32.mrb[0].mxu0
        %940 = vdwg.mxu0
        %v941 = vadd.f32 %v737, %v923
        %v942 = vadd.f32 %v742, %v928
        %v943 = vadd.f32 %v747, %v933
        %v944 = vadd.f32 %v752, %v938
        %v945 = vld [vmem:[%s3] sm:$0x1]
        %v947 = vlaneseq
        %v948 = vshrl.u32 %v947, 7
        %v949 = vsub.s32 0, %v948
        %v950 = vrot.slane %v945, %v949
        %v952 = vadd.f32 %v941, %v950
        %v953 = vadd.f32 %v942, %v950
        %v954 = vadd.f32 %v943, %v950
        %v955 = vadd.f32 %v944, %v950
        %v956 = vmax.f32 %v952, 0.0
        %v957 = vmax.f32 %v953, 0.0
        %v958 = vmax.f32 %v954, 0.0
        %v959 = vmax.f32 %v955, 0.0
        %v960 = vld [vmem:[#allocation5] sm:$0xff]
        %v961 = vld [vmem:[#allocation5 + $0x8] sm:$0xff]
        %v962 = vld [vmem:[#allocation5 + $0x10] sm:$0xff]
        %v963 = vld [vmem:[#allocation5 + $0x18] sm:$0xff]
        %v964 = vld [vmem:[#allocation5 + $0x20] sm:$0xff]
        %v965 = vld [vmem:[#allocation5 + $0x28] sm:$0xff]
        %v966 = vld [vmem:[#allocation5 + $0x30] sm:$0xff]
        %v967 = vld [vmem:[#allocation5 + $0x38] sm:$0xff]
        %v969 = vsel %vm385, %v956, 0
        %v972 = vsel %vm385, %v957, 0
        %v975 = vsel %vm385, %v958, 0
        %v978 = vsel %vm385, %v959, 0
        %980 = vmatprep.subr.mxu0 0.0
        %981 = vmatpush1.msra.mxu0 %v960
        %982 = vmatprep.subr.mxu0 0.0
        %983 = vmatpush1.msra.mxu0 %v961
        %984 = vmatprep.subr.mxu0 0.0
        %985 = vmatpush1.msra.mxu0 %v962
        %986 = vmatprep.subr.mxu0 0.0
        %987 = vmatpush1.msra.mxu0 %v963
        %988 = vmatprep.subr.mxu0 0.0
        %989 = vmatpush1.msra.mxu0 %v964
        %990 = vmatprep.subr.mxu0 0.0
        %991 = vmatpush1.msra.mxu0 %v965
        %992 = vmatprep.subr.mxu0 0.0
        %993 = vmatpush1.msra.mxu0 %v966
        %994 = vmatprep.subr.mxu0 0.0
        %995 = vmatpush1.msra.mxu0 %v967
        %996 = vmatprep.subr.mxu0 0.0
        %997 = vmatpush1.msra.mxu0 0.0
        %998 = vmatprep.subr.mxu0 0.0
        %999 = vmatpush1.msra.mxu0 0.0
        %1000 = vmatprep.subr.mxu0 0.0
        %1001 = vmatpush1.msra.mxu0 0.0
        %1002 = vmatprep.subr.mxu0 0.0
        %1003 = vmatpush1.msra.mxu0 0.0
        %1004 = vmatprep.subr.mxu0 0.0
        %1005 = vmatpush1.msra.mxu0 0.0
        %1006 = vmatprep.subr.mxu0 0.0
        %1007 = vmatpush1.msra.mxu0 0.0
        %1008 = vmatprep.subr.mxu0 0.0
        %1009 = vmatpush1.msra.mxu0 0.0
        %1010 = vmatprep.subr.mxu0 0.0
        %1011 = vmatpush1.msra.mxu0 0.0
        %1012 = vmatprep.subr.mxu0 0.0
        %1013 = vmatpush1.msra.mxu0 0.0
        %1014 = vmatprep.subr.mxu0 0.0
        %1015 = vmatpush1.msra.mxu0 0.0
        %1016 = vmatprep.subr.mxu0 0.0
        %1017 = vmatpush1.msra.mxu0 0.0
        %1018 = vmatprep.subr.mxu0 0.0
        %1019 = vmatpush1.msra.mxu0 0.0
        %1020 = vmatprep.subr.mxu0 0.0
        %1021 = vmatpush1.msra.mxu0 0.0
        %1022 = vmatprep.subr.mxu0 0.0
        %1023 = vmatpush1.msra.mxu0 0.0
        %1024 = vmatprep.subr.mxu0 0.0
        %1025 = vmatpush1.msra.mxu0 0.0
        %1026 = vmatprep.subr.mxu0 0.0
        %1027 = vmatpush1.msra.mxu0 0.0
        %1028 = vmatprep.subr.mxu0 0.0
        %1029 = vmatpush1.msra.mxu0 0.0
        %1030 = vmatprep.subr.mxu0 0.0
        %1031 = vmatpush1.msra.mxu0 0.0
        %1032 = vmatprep.subr.mxu0 0.0
        %1033 = vmatpush1.msra.mxu0 0.0
        %1034 = vmatprep.subr.mxu0 0.0
        %1035 = vmatpush1.msra.mxu0 0.0
        %1036 = vmatprep.subr.mxu0 0.0
        %1037 = vmatpush1.msra.mxu0 0.0
        %1038 = vmatprep.subr.mxu0 0.0
        %1039 = vmatpush1.msra.mxu0 0.0
        %1040 = vmatprep.subr.mxu0 0.0
        %1041 = vmatpush1.msra.mxu0 0.0
        %1042 = vmatprep.subr.mxu0 0.0
        %1043 = vmatpush1.msra.mxu0 0.0
        %1044 = vmatprep.mubr.f32.mxu0 0.0
        %1045 = vmatmul.mubr.f32.gmra.mrb[0].mxu0 %v969
        %v1046 = vpop.f32.mrb[0].mxu0
        %v1047 = vadd.f32 0.0, %v1046
        %v1048 = vpop.f32.mrb[0].mxu0
        %1049 = vmatprep.mubr.f32.mxu0 0.0
        %1050 = vmatmul.mubr.f32.gmra.mrb[0].mxu0 %v972
        %v1051 = vpop.f32.mrb[0].mxu0
        %v1052 = vadd.f32 0.0, %v1051
        %v1053 = vpop.f32.mrb[0].mxu0
        %1054 = vmatprep.mubr.f32.mxu0 0.0
        %1055 = vmatmul.mubr.f32.gmra.mrb[0].mxu0 %v975
        %v1056 = vpop.f32.mrb[0].mxu0
        %v1057 = vadd.f32 0.0, %v1056
        %v1058 = vpop.f32.mrb[0].mxu0
        %1059 = vmatprep.mubr.f32.mxu0 0.0
        %1060 = vmatmul.mubr.f32.gmra.mrb[0].mxu0 %v978
        %v1061 = vpop.f32.mrb[0].mxu0
        %v1062 = vadd.f32 0.0, %v1061
        %v1063 = vpop.f32.mrb[0].mxu0
        %1064 = vdwg.mxu0
        %v1065 = vld [vmem:[%s4] sm:$0xff]
        %v1066 = vld [vmem:[%s4 + $0x8] sm:$0xff]
        %v1067 = vld [vmem:[%s4 + $0x10] sm:$0xff]
        %v1068 = vld [vmem:[%s4 + $0x18] sm:$0xff]
        %s1069 = scalar_lea.vmem [#allocation5], 64
        %v1070 = vld [vmem:[%s1069] sm:$0xff]
        %v1071 = vld [vmem:[%s1069 + $0x8] sm:$0xff]
        %v1072 = vld [vmem:[%s1069 + $0x10] sm:$0xff]
        %v1073 = vld [vmem:[%s1069 + $0x18] sm:$0xff]
        %v1074 = vld [vmem:[%s1069 + $0x20] sm:$0xff]
        %v1075 = vld [vmem:[%s1069 + $0x28] sm:$0xff]
        %v1076 = vld [vmem:[%s1069 + $0x30] sm:$0xff]
        %v1077 = vld [vmem:[%s1069 + $0x38] sm:$0xff]
        %1078 = vmatprep.subr.mxu0 0.0
        %1079 = vmatpush1.msra.mxu0 %v1070
        %1080 = vmatprep.subr.mxu0 0.0
        %1081 = vmatpush1.msra.mxu0 %v1071
        %1082 = vmatprep.subr.mxu0 0.0
        %1083 = vmatpush1.msra.mxu0 %v1072
        %1084 = vmatprep.subr.mxu0 0.0
        %1085 = vmatpush1.msra.mxu0 %v1073
        %1086 = vmatprep.subr.mxu0 0.0
        %1087 = vmatpush1.msra.mxu0 %v1074
        %1088 = vmatprep.subr.mxu0 0.0
        %1089 = vmatpush1.msra.mxu0 %v1075
        %1090 = vmatprep.subr.mxu0 0.0
        %1091 = vmatpush1.msra.mxu0 %v1076
        %1092 = vmatprep.subr.mxu0 0.0
        %1093 = vmatpush1.msra.mxu0 %v1077
        %1094 = vmatprep.subr.mxu0 0.0
        %1095 = vmatpush1.msra.mxu0 0.0
        %1096 = vmatprep.subr.mxu0 0.0
        %1097 = vmatpush1.msra.mxu0 0.0
        %1098 = vmatprep.subr.mxu0 0.0
        %1099 = vmatpush1.msra.mxu0 0.0
        %1100 = vmatprep.subr.mxu0 0.0
        %1101 = vmatpush1.msra.mxu0 0.0
        %1102 = vmatprep.subr.mxu0 0.0
        %1103 = vmatpush1.msra.mxu0 0.0
        %1104 = vmatprep.subr.mxu0 0.0
        %1105 = vmatpush1.msra.mxu0 0.0
        %1106 = vmatprep.subr.mxu0 0.0
        %1107 = vmatpush1.msra.mxu0 0.0
        %1108 = vmatprep.subr.mxu0 0.0
        %1109 = vmatpush1.msra.mxu0 0.0
        %1110 = vmatprep.subr.mxu0 0.0
        %1111 = vmatpush1.msra.mxu0 0.0
        %1112 = vmatprep.subr.mxu0 0.0
        %1113 = vmatpush1.msra.mxu0 0.0
        %1114 = vmatprep.subr.mxu0 0.0
        %1115 = vmatpush1.msra.mxu0 0.0
        %1116 = vmatprep.subr.mxu0 0.0
        %1117 = vmatpush1.msra.mxu0 0.0
        %1118 = vmatprep.subr.mxu0 0.0
        %1119 = vmatpush1.msra.mxu0 0.0
        %1120 = vmatprep.subr.mxu0 0.0
        %1121 = vmatpush1.msra.mxu0 0.0
        %1122 = vmatprep.subr.mxu0 0.0
        %1123 = vmatpush1.msra.mxu0 0.0
        %1124 = vmatprep.subr.mxu0 0.0
        %1125 = vmatpush1.msra.mxu0 0.0
        %1126 = vmatprep.subr.mxu0 0.0
        %1127 = vmatpush1.msra.mxu0 0.0
        %1128 = vmatprep.subr.mxu0 0.0
        %1129 = vmatpush1.msra.mxu0 0.0
        %1130 = vmatprep.subr.mxu0 0.0
        %1131 = vmatpush1.msra.mxu0 0.0
        %1132 = vmatprep.subr.mxu0 0.0
        %1133 = vmatpush1.msra.mxu0 0.0
        %1134 = vmatprep.subr.mxu0 0.0
        %1135 = vmatpush1.msra.mxu0 0.0
        %1136 = vmatprep.subr.mxu0 0.0
        %1137 = vmatpush1.msra.mxu0 0.0
        %1138 = vmatprep.subr.mxu0 0.0
        %1139 = vmatpush1.msra.mxu0 0.0
        %1140 = vmatprep.subr.mxu0 0.0
        %1141 = vmatpush1.msra.mxu0 0.0
        %1142 = vmatprep.mubr.f32.mxu0 0.0
        %1143 = vmatmul.mubr.f32.gmra.mrb[0].mxu0 %v969
        %v1144 = vpop.f32.mrb[0].mxu0
        %v1145 = vadd.f32 0.0, %v1144
        %v1146 = vpop.f32.mrb[0].mxu0
        %1147 = vmatprep.mubr.f32.mxu0 0.0
        %1148 = vmatmul.mubr.f32.gmra.mrb[0].mxu0 %v972
        %v1149 = vpop.f32.mrb[0].mxu0
        %v1150 = vadd.f32 0.0, %v1149
        %v1151 = vpop.f32.mrb[0].mxu0
        %1152 = vmatprep.mubr.f32.mxu0 0.0
        %1153 = vmatmul.mubr.f32.gmra.mrb[0].mxu0 %v975
        %v1154 = vpop.f32.mrb[0].mxu0
        %v1155 = vadd.f32 0.0, %v1154
        %v1156 = vpop.f32.mrb[0].mxu0
        %1157 = vmatprep.mubr.f32.mxu0 0.0
        %1158 = vmatmul.mubr.f32.gmra.mrb[0].mxu0 %v978
        %v1159 = vpop.f32.mrb[0].mxu0
        %v1160 = vadd.f32 0.0, %v1159
        %v1161 = vpop.f32.mrb[0].mxu0
        %1162 = vdwg.mxu0
        %s1163 = scalar_lea.vmem %s4, 32
        %v1164 = vld [vmem:[%s1163] sm:$0xff]
        %v1165 = vld [vmem:[%s1163 + $0x8] sm:$0xff]
        %v1166 = vld [vmem:[%s1163 + $0x10] sm:$0xff]
        %v1167 = vld [vmem:[%s1163 + $0x18] sm:$0xff]
        %vm1168 = vcmask 261120
        %v1170 = vsel %vm1168, %v1164, 0
        %v1173 = vsel %vm1168, %v1165, 0
        %v1176 = vsel %vm1168, %v1166, 0
        %v1179 = vsel %vm1168, %v1167, 0
        %1181 = vmatprep.subr.mxu0 0.0
        %1182 = vmatpush1.msra.mxu0 %v1145
        %1183 = vmatprep.subr.mxu0 0.0
        %1184 = vmatpush1.msra.mxu0 %v1150
        %1185 = vmatprep.subr.mxu0 0.0
        %1186 = vmatpush1.msra.mxu0 %v1155
        %1187 = vmatprep.subr.mxu0 0.0
        %1188 = vmatpush1.msra.mxu0 %v1160
        %1189 = vmatprep.subr.mxu0 0.0
        %1190 = vmatpush1.msra.mxu0 0.0
        %1191 = vmatprep.subr.mxu0 0.0
        %1192 = vmatpush1.msra.mxu0 0.0
        %1193 = vmatprep.subr.mxu0 0.0
        %1194 = vmatpush1.msra.mxu0 0.0
        %1195 = vmatprep.subr.mxu0 0.0
        %1196 = vmatpush1.msra.mxu0 0.0
        %1197 = vmatprep.subr.mxu0 0.0
        %1198 = vmatpush1.msra.mxu0 0.0
        %1199 = vmatprep.subr.mxu0 0.0
        %1200 = vmatpush1.msra.mxu0 0.0
        %1201 = vmatprep.subr.mxu0 0.0
        %1202 = vmatpush1.msra.mxu0 0.0
        %1203 = vmatprep.subr.mxu0 0.0
        %1204 = vmatpush1.msra.mxu0 0.0
        %1205 = vmatprep.subr.mxu0 0.0
        %1206 = vmatpush1.msra.mxu0 0.0
        %1207 = vmatprep.subr.mxu0 0.0
        %1208 = vmatpush1.msra.mxu0 0.0
        %1209 = vmatprep.subr.mxu0 0.0
        %1210 = vmatpush1.msra.mxu0 0.0
        %1211 = vmatprep.subr.mxu0 0.0
        %1212 = vmatpush1.msra.mxu0 0.0
        %1213 = vmatprep.subr.mxu0 0.0
        %1214 = vmatpush1.msra.mxu0 0.0
        %1215 = vmatprep.subr.mxu0 0.0
        %1216 = vmatpush1.msra.mxu0 0.0
        %1217 = vmatprep.subr.mxu0 0.0
        %1218 = vmatpush1.msra.mxu0 0.0
        %1219 = vmatprep.subr.mxu0 0.0
        %1220 = vmatpush1.msra.mxu0 0.0
        %1221 = vmatprep.subr.mxu0 0.0
        %1222 = vmatpush1.msra.mxu0 0.0
        %1223 = vmatprep.subr.mxu0 0.0
        %1224 = vmatpush1.msra.mxu0 0.0
        %1225 = vmatprep.subr.mxu0 0.0
        %1226 = vmatpush1.msra.mxu0 0.0
        %1227 = vmatprep.subr.mxu0 0.0
        %1228 = vmatpush1.msra.mxu0 0.0
        %1229 = vmatprep.subr.mxu0 0.0
        %1230 = vmatpush1.msra.mxu0 0.0
        %1231 = vmatprep.subr.mxu0 0.0
        %1232 = vmatpush1.msra.mxu0 0.0
        %1233 = vmatprep.subr.mxu0 0.0
        %1234 = vmatpush1.msra.mxu0 0.0
        %1235 = vmatprep.subr.mxu0 0.0
        %1236 = vmatpush1.msra.mxu0 0.0
        %1237 = vmatprep.subr.mxu0 0.0
        %1238 = vmatpush1.msra.mxu0 0.0
        %1239 = vmatprep.subr.mxu0 0.0
        %1240 = vmatpush1.msra.mxu0 0.0
        %1241 = vmatprep.subr.mxu0 0.0
        %1242 = vmatpush1.msra.mxu0 0.0
        %1243 = vmatprep.subr.mxu0 0.0
        %1244 = vmatpush1.msra.mxu0 0.0
        %1245 = vmatprep.mubr.f32.mxu0 0.0
        %1246 = vmatmul.mubr.f32.gmra.mrb[0].mxu0 %v1170
        %v1247 = vpop.f32.mrb[0].mxu0
        %v1248 = vadd.f32 0.0, %v1247
        %v1249 = vpop.f32.mrb[0].mxu0
        %1250 = vmatprep.mubr.f32.mxu0 0.0
        %1251 = vmatmul.mubr.f32.gmra.mrb[0].mxu0 %v1173
        %v1252 = vpop.f32.mrb[0].mxu0
        %v1253 = vadd.f32 0.0, %v1252
        %v1254 = vpop.f32.mrb[0].mxu0
        %1255 = vmatprep.mubr.f32.mxu0 0.0
        %1256 = vmatmul.mubr.f32.gmra.mrb[0].mxu0 %v1176
        %v1257 = vpop.f32.mrb[0].mxu0
        %v1258 = vadd.f32 0.0, %v1257
        %v1259 = vpop.f32.mrb[0].mxu0
        %1260 = vmatprep.mubr.f32.mxu0 0.0
        %1261 = vmatmul.mubr.f32.gmra.mrb[0].mxu0 %v1179
        %v1262 = vpop.f32.mrb[0].mxu0
        %v1263 = vadd.f32 0.0, %v1262
        %v1264 = vpop.f32.mrb[0].mxu0
        %1265 = vdwg.mxu0
        %v1267 = vsel %vm1168, %v1065, 0
        %v1270 = vsel %vm1168, %v1066, 0
        %v1273 = vsel %vm1168, %v1067, 0
        %v1276 = vsel %vm1168, %v1068, 0
        %1278 = vmatprep.subr.mxu0 0.0
        %1279 = vmatpush1.msra.mxu0 %v1047
        %1280 = vmatprep.subr.mxu0 0.0
        %1281 = vmatpush1.msra.mxu0 %v1052
        %1282 = vmatprep.subr.mxu0 0.0
        %1283 = vmatpush1.msra.mxu0 %v1057
        %1284 = vmatprep.subr.mxu0 0.0
        %1285 = vmatpush1.msra.mxu0 %v1062
        %1286 = vmatprep.subr.mxu0 0.0
        %1287 = vmatpush1.msra.mxu0 0.0
        %1288 = vmatprep.subr.mxu0 0.0
        %1289 = vmatpush1.msra.mxu0 0.0
        %1290 = vmatprep.subr.mxu0 0.0
        %1291 = vmatpush1.msra.mxu0 0.0
        %1292 = vmatprep.subr.mxu0 0.0
        %1293 = vmatpush1.msra.mxu0 0.0
        %1294 = vmatprep.subr.mxu0 0.0
        %1295 = vmatpush1.msra.mxu0 0.0
        %1296 = vmatprep.subr.mxu0 0.0
        %1297 = vmatpush1.msra.mxu0 0.0
        %1298 = vmatprep.subr.mxu0 0.0
        %1299 = vmatpush1.msra.mxu0 0.0
        %1300 = vmatprep.subr.mxu0 0.0
        %1301 = vmatpush1.msra.mxu0 0.0
        %1302 = vmatprep.subr.mxu0 0.0
        %1303 = vmatpush1.msra.mxu0 0.0
        %1304 = vmatprep.subr.mxu0 0.0
        %1305 = vmatpush1.msra.mxu0 0.0
        %1306 = vmatprep.subr.mxu0 0.0
        %1307 = vmatpush1.msra.mxu0 0.0
        %1308 = vmatprep.subr.mxu0 0.0
        %1309 = vmatpush1.msra.mxu0 0.0
        %1310 = vmatprep.subr.mxu0 0.0
        %1311 = vmatpush1.msra.mxu0 0.0
        %1312 = vmatprep.subr.mxu0 0.0
        %1313 = vmatpush1.msra.mxu0 0.0
        %1314 = vmatprep.subr.mxu0 0.0
        %1315 = vmatpush1.msra.mxu0 0.0
        %1316 = vmatprep.subr.mxu0 0.0
        %1317 = vmatpush1.msra.mxu0 0.0
        %1318 = vmatprep.subr.mxu0 0.0
        %1319 = vmatpush1.msra.mxu0 0.0
        %1320 = vmatprep.subr.mxu0 0.0
        %1321 = vmatpush1.msra.mxu0 0.0
        %1322 = vmatprep.subr.mxu0 0.0
        %1323 = vmatpush1.msra.mxu0 0.0
        %1324 = vmatprep.subr.mxu0 0.0
        %1325 = vmatpush1.msra.mxu0 0.0
        %1326 = vmatprep.subr.mxu0 0.0
        %1327 = vmatpush1.msra.mxu0 0.0
        %1328 = vmatprep.subr.mxu0 0.0
        %1329 = vmatpush1.msra.mxu0 0.0
        %1330 = vmatprep.subr.mxu0 0.0
        %1331 = vmatpush1.msra.mxu0 0.0
        %1332 = vmatprep.subr.mxu0 0.0
        %1333 = vmatpush1.msra.mxu0 0.0
        %1334 = vmatprep.subr.mxu0 0.0
        %1335 = vmatpush1.msra.mxu0 0.0
        %1336 = vmatprep.subr.mxu0 0.0
        %1337 = vmatpush1.msra.mxu0 0.0
        %1338 = vmatprep.subr.mxu0 0.0
        %1339 = vmatpush1.msra.mxu0 0.0
        %1340 = vmatprep.subr.mxu0 0.0
        %1341 = vmatpush1.msra.mxu0 0.0
        %1342 = vmatprep.mubr.f32.mxu0 0.0
        %1343 = vmatmul.mubr.f32.gmra.mrb[0].mxu0 %v1267
        %v1344 = vpop.f32.mrb[0].mxu0
        %v1345 = vadd.f32 %v1248, %v1344
        %v1346 = vpop.f32.mrb[0].mxu0
        %1347 = vmatprep.mubr.f32.mxu0 0.0
        %1348 = vmatmul.mubr.f32.gmra.mrb[0].mxu0 %v1270
        %v1349 = vpop.f32.mrb[0].mxu0
        %v1350 = vadd.f32 %v1253, %v1349
        %v1351 = vpop.f32.mrb[0].mxu0
        %1352 = vmatprep.mubr.f32.mxu0 0.0
        %1353 = vmatmul.mubr.f32.gmra.mrb[0].mxu0 %v1273
        %v1354 = vpop.f32.mrb[0].mxu0
        %v1355 = vadd.f32 %v1258, %v1354
        %v1356 = vpop.f32.mrb[0].mxu0
        %1357 = vmatprep.mubr.f32.mxu0 0.0
        %1358 = vmatmul.mubr.f32.gmra.mrb[0].mxu0 %v1276
        %v1359 = vpop.f32.mrb[0].mxu0
        %v1360 = vadd.f32 %v1263, %v1359
        %v1361 = vpop.f32.mrb[0].mxu0
        %1362 = vdwg.mxu0
        %s1363 = scalar_lea.vmem [#allocation5], 128
        %v1364 = vld [vmem:[%s1363] sm:$0xff]
        %v1365 = vld [vmem:[%s1363 + $0x8] sm:$0xff]
        %v1366 = vld [vmem:[%s1363 + $0x10] sm:$0xff]
        %v1367 = vld [vmem:[%s1363 + $0x18] sm:$0xff]
        %v1368 = vld [vmem:[%s1363 + $0x20] sm:$0xff]
        %v1369 = vld [vmem:[%s1363 + $0x28] sm:$0xff]
        %v1370 = vld [vmem:[%s1363 + $0x30] sm:$0xff]
        %v1371 = vld [vmem:[%s1363 + $0x38] sm:$0xff]
        %1372 = vmatprep.subr.mxu0 0.0
        %1373 = vmatpush1.msra.mxu0 %v1364
        %1374 = vmatprep.subr.mxu0 0.0
        %1375 = vmatpush1.msra.mxu0 %v1365
        %1376 = vmatprep.subr.mxu0 0.0
        %1377 = vmatpush1.msra.mxu0 %v1366
        %1378 = vmatprep.subr.mxu0 0.0
        %1379 = vmatpush1.msra.mxu0 %v1367
        %1380 = vmatprep.subr.mxu0 0.0
        %1381 = vmatpush1.msra.mxu0 %v1368
        %1382 = vmatprep.subr.mxu0 0.0
        %1383 = vmatpush1.msra.mxu0 %v1369
        %1384 = vmatprep.subr.mxu0 0.0
        %1385 = vmatpush1.msra.mxu0 %v1370
        %1386 = vmatprep.subr.mxu0 0.0
        %1387 = vmatpush1.msra.mxu0 %v1371
        %1388 = vmatprep.subr.mxu0 0.0
        %1389 = vmatpush1.msra.mxu0 0.0
        %1390 = vmatprep.subr.mxu0 0.0
        %1391 = vmatpush1.msra.mxu0 0.0
        %1392 = vmatprep.subr.mxu0 0.0
        %1393 = vmatpush1.msra.mxu0 0.0
        %1394 = vmatprep.subr.mxu0 0.0
        %1395 = vmatpush1.msra.mxu0 0.0
        %1396 = vmatprep.subr.mxu0 0.0
        %1397 = vmatpush1.msra.mxu0 0.0
        %1398 = vmatprep.subr.mxu0 0.0
        %1399 = vmatpush1.msra.mxu0 0.0
        %1400 = vmatprep.subr.mxu0 0.0
        %1401 = vmatpush1.msra.mxu0 0.0
        %1402 = vmatprep.subr.mxu0 0.0
        %1403 = vmatpush1.msra.mxu0 0.0
        %1404 = vmatprep.subr.mxu0 0.0
        %1405 = vmatpush1.msra.mxu0 0.0
        %1406 = vmatprep.subr.mxu0 0.0
        %1407 = vmatpush1.msra.mxu0 0.0
        %1408 = vmatprep.subr.mxu0 0.0
        %1409 = vmatpush1.msra.mxu0 0.0
        %1410 = vmatprep.subr.mxu0 0.0
        %1411 = vmatpush1.msra.mxu0 0.0
        %1412 = vmatprep.subr.mxu0 0.0
        %1413 = vmatpush1.msra.mxu0 0.0
        %1414 = vmatprep.subr.mxu0 0.0
        %1415 = vmatpush1.msra.mxu0 0.0
        %1416 = vmatprep.subr.mxu0 0.0
        %1417 = vmatpush1.msra.mxu0 0.0
        %1418 = vmatprep.subr.mxu0 0.0
        %1419 = vmatpush1.msra.mxu0 0.0
        %1420 = vmatprep.subr.mxu0 0.0
        %1421 = vmatpush1.msra.mxu0 0.0
        %1422 = vmatprep.subr.mxu0 0.0
        %1423 = vmatpush1.msra.mxu0 0.0
        %1424 = vmatprep.subr.mxu0 0.0
        %1425 = vmatpush1.msra.mxu0 0.0
        %1426 = vmatprep.subr.mxu0 0.0
        %1427 = vmatpush1.msra.mxu0 0.0
        %1428 = vmatprep.subr.mxu0 0.0
        %1429 = vmatpush1.msra.mxu0 0.0
        %1430 = vmatprep.subr.mxu0 0.0
        %1431 = vmatpush1.msra.mxu0 0.0
        %1432 = vmatprep.subr.mxu0 0.0
        %1433 = vmatpush1.msra.mxu0 0.0
        %1434 = vmatprep.subr.mxu0 0.0
        %1435 = vmatpush1.msra.mxu0 0.0
        %1436 = vmatprep.mubr.f32.mxu0 0.0
        %1437 = vmatmul.mubr.f32.gmra.mrb[0].mxu0 %v969
        %v1438 = vpop.f32.mrb[0].mxu0
        %v1439 = vadd.f32 0.0, %v1438
        %v1440 = vpop.f32.mrb[0].mxu0
        %1441 = vmatprep.mubr.f32.mxu0 0.0
        %1442 = vmatmul.mubr.f32.gmra.mrb[0].mxu0 %v972
        %v1443 = vpop.f32.mrb[0].mxu0
        %v1444 = vadd.f32 0.0, %v1443
        %v1445 = vpop.f32.mrb[0].mxu0
        %1446 = vmatprep.mubr.f32.mxu0 0.0
        %1447 = vmatmul.mubr.f32.gmra.mrb[0].mxu0 %v975
        %v1448 = vpop.f32.mrb[0].mxu0
        %v1449 = vadd.f32 0.0, %v1448
        %v1450 = vpop.f32.mrb[0].mxu0
        %1451 = vmatprep.mubr.f32.mxu0 0.0
        %1452 = vmatmul.mubr.f32.gmra.mrb[0].mxu0 %v978
        %v1453 = vpop.f32.mrb[0].mxu0
        %v1454 = vadd.f32 0.0, %v1453
        %v1455 = vpop.f32.mrb[0].mxu0
        %1456 = vdwg.mxu0
        %s1457 = scalar_lea.vmem %s4, 64
        %v1458 = vld [vmem:[%s1457] sm:$0xff]
        %v1459 = vld [vmem:[%s1457 + $0x8] sm:$0xff]
        %v1460 = vld [vmem:[%s1457 + $0x10] sm:$0xff]
        %v1461 = vld [vmem:[%s1457 + $0x18] sm:$0xff]
        %v1463 = vsel %vm1168, %v1458, 0
        %v1466 = vsel %vm1168, %v1459, 0
        %v1469 = vsel %vm1168, %v1460, 0
        %v1472 = vsel %vm1168, %v1461, 0
        %1474 = vmatprep.subr.mxu0 0.0
        %1475 = vmatpush1.msra.mxu0 %v1439
        %1476 = vmatprep.subr.mxu0 0.0
        %1477 = vmatpush1.msra.mxu0 %v1444
        %1478 = vmatprep.subr.mxu0 0.0
        %1479 = vmatpush1.msra.mxu0 %v1449
        %1480 = vmatprep.subr.mxu0 0.0
        %1481 = vmatpush1.msra.mxu0 %v1454
        %1482 = vmatprep.subr.mxu0 0.0
        %1483 = vmatpush1.msra.mxu0 0.0
        %1484 = vmatprep.subr.mxu0 0.0
        %1485 = vmatpush1.msra.mxu0 0.0
        %1486 = vmatprep.subr.mxu0 0.0
        %1487 = vmatpush1.msra.mxu0 0.0
        %1488 = vmatprep.subr.mxu0 0.0
        %1489 = vmatpush1.msra.mxu0 0.0
        %1490 = vmatprep.subr.mxu0 0.0
        %1491 = vmatpush1.msra.mxu0 0.0
        %1492 = vmatprep.subr.mxu0 0.0
        %1493 = vmatpush1.msra.mxu0 0.0
        %1494 = vmatprep.subr.mxu0 0.0
        %1495 = vmatpush1.msra.mxu0 0.0
        %1496 = vmatprep.subr.mxu0 0.0
        %1497 = vmatpush1.msra.mxu0 0.0
        %1498 = vmatprep.subr.mxu0 0.0
        %1499 = vmatpush1.msra.mxu0 0.0
        %1500 = vmatprep.subr.mxu0 0.0
        %1501 = vmatpush1.msra.mxu0 0.0
        %1502 = vmatprep.subr.mxu0 0.0
        %1503 = vmatpush1.msra.mxu0 0.0
        %1504 = vmatprep.subr.mxu0 0.0
        %1505 = vmatpush1.msra.mxu0 0.0
        %1506 = vmatprep.subr.mxu0 0.0
        %1507 = vmatpush1.msra.mxu0 0.0
        %1508 = vmatprep.subr.mxu0 0.0
        %1509 = vmatpush1.msra.mxu0 0.0
        %1510 = vmatprep.subr.mxu0 0.0
        %1511 = vmatpush1.msra.mxu0 0.0
        %1512 = vmatprep.subr.mxu0 0.0
        %1513 = vmatpush1.msra.mxu0 0.0
        %1514 = vmatprep.subr.mxu0 0.0
        %1515 = vmatpush1.msra.mxu0 0.0
        %1516 = vmatprep.subr.mxu0 0.0
        %1517 = vmatpush1.msra.mxu0 0.0
        %1518 = vmatprep.subr.mxu0 0.0
        %1519 = vmatpush1.msra.mxu0 0.0
        %1520 = vmatprep.subr.mxu0 0.0
        %1521 = vmatpush1.msra.mxu0 0.0
        %1522 = vmatprep.subr.mxu0 0.0
        %1523 = vmatpush1.msra.mxu0 0.0
        %1524 = vmatprep.subr.mxu0 0.0
        %1525 = vmatpush1.msra.mxu0 0.0
        %1526 = vmatprep.subr.mxu0 0.0
        %1527 = vmatpush1.msra.mxu0 0.0
        %1528 = vmatprep.subr.mxu0 0.0
        %1529 = vmatpush1.msra.mxu0 0.0
        %1530 = vmatprep.subr.mxu0 0.0
        %1531 = vmatpush1.msra.mxu0 0.0
        %1532 = vmatprep.subr.mxu0 0.0
        %1533 = vmatpush1.msra.mxu0 0.0
        %1534 = vmatprep.subr.mxu0 0.0
        %1535 = vmatpush1.msra.mxu0 0.0
        %1536 = vmatprep.subr.mxu0 0.0
        %1537 = vmatpush1.msra.mxu0 0.0
        %1538 = vmatprep.mubr.f32.mxu0 0.0
        %1539 = vmatmul.mubr.f32.gmra.mrb[0].mxu0 %v1463
        %v1540 = vpop.f32.mrb[0].mxu0
        %v1541 = vadd.f32 0.0, %v1540
        %v1542 = vpop.f32.mrb[0].mxu0
        %1543 = vmatprep.mubr.f32.mxu0 0.0
        %1544 = vmatmul.mubr.f32.gmra.mrb[0].mxu0 %v1466
        %v1545 = vpop.f32.mrb[0].mxu0
        %v1546 = vadd.f32 0.0, %v1545
        %v1547 = vpop.f32.mrb[0].mxu0
        %1548 = vmatprep.mubr.f32.mxu0 0.0
        %1549 = vmatmul.mubr.f32.gmra.mrb[0].mxu0 %v1469
        %v1550 = vpop.f32.mrb[0].mxu0
        %v1551 = vadd.f32 0.0, %v1550
        %v1552 = vpop.f32.mrb[0].mxu0
        %1553 = vmatprep.mubr.f32.mxu0 0.0
        %1554 = vmatmul.mubr.f32.gmra.mrb[0].mxu0 %v1472
        %v1555 = vpop.f32.mrb[0].mxu0
        %v1556 = vadd.f32 0.0, %v1555
        %v1557 = vpop.f32.mrb[0].mxu0
        %1558 = vdwg.mxu0
        %v1559 = vadd.f32 %v1345, %v1541
        %v1560 = vadd.f32 %v1350, %v1546
        %v1561 = vadd.f32 %v1355, %v1551
        %v1562 = vadd.f32 %v1360, %v1556
        %v1563 = vld [vmem:[%s6] sm:$0x1]
        %v1565 = vlaneseq
        %v1566 = vshrl.u32 %v1565, 7
        %v1567 = vsub.s32 0, %v1566
        %v1568 = vrot.slane %v1563, %v1567
        %v1570 = vadd.f32 %v1559, %v1568
        %v1571 = vadd.f32 %v1560, %v1568
        %v1572 = vadd.f32 %v1561, %v1568
        %v1573 = vadd.f32 %v1562, %v1568
        %v1574 = vmax.f32 %v1570, 0.0
        %v1575 = vmax.f32 %v1571, 0.0
        %v1576 = vmax.f32 %v1572, 0.0
        %v1577 = vmax.f32 %v1573, 0.0
        %v1578 = vld [vmem:[#allocation7] sm:$0xff]
        %v1579 = vld [vmem:[#allocation7 + $0x8] sm:$0xff]
        %v1580 = vld [vmem:[#allocation7 + $0x10] sm:$0xff]
        %v1581 = vld [vmem:[#allocation7 + $0x18] sm:$0xff]
        %v1582 = vld [vmem:[#allocation7 + $0x20] sm:$0xff]
        %v1583 = vld [vmem:[#allocation7 + $0x28] sm:$0xff]
        %v1584 = vld [vmem:[#allocation7 + $0x30] sm:$0xff]
        %v1585 = vld [vmem:[#allocation7 + $0x38] sm:$0xff]
        %v1587 = vsel %vm385, %v1574, 0
        %v1590 = vsel %vm385, %v1575, 0
        %v1593 = vsel %vm385, %v1576, 0
        %v1596 = vsel %vm385, %v1577, 0
        %1598 = vmatprep.subr.mxu0 0.0
        %1599 = vmatpush1.msra.mxu0 %v1578
        %1600 = vmatprep.subr.mxu0 0.0
        %1601 = vmatpush1.msra.mxu0 %v1579
        %1602 = vmatprep.subr.mxu0 0.0
        %1603 = vmatpush1.msra.mxu0 %v1580
        %1604 = vmatprep.subr.mxu0 0.0
        %1605 = vmatpush1.msra.mxu0 %v1581
        %1606 = vmatprep.subr.mxu0 0.0
        %1607 = vmatpush1.msra.mxu0 %v1582
        %1608 = vmatprep.subr.mxu0 0.0
        %1609 = vmatpush1.msra.mxu0 %v1583
        %1610 = vmatprep.subr.mxu0 0.0
        %1611 = vmatpush1.msra.mxu0 %v1584
        %1612 = vmatprep.subr.mxu0 0.0
        %1613 = vmatpush1.msra.mxu0 %v1585
        %1614 = vmatprep.subr.mxu0 0.0
        %1615 = vmatpush1.msra.mxu0 0.0
        %1616 = vmatprep.subr.mxu0 0.0
        %1617 = vmatpush1.msra.mxu0 0.0
        %1618 = vmatprep.subr.mxu0 0.0
        %1619 = vmatpush1.msra.mxu0 0.0
        %1620 = vmatprep.subr.mxu0 0.0
        %1621 = vmatpush1.msra.mxu0 0.0
        %1622 = vmatprep.subr.mxu0 0.0
        %1623 = vmatpush1.msra.mxu0 0.0
        %1624 = vmatprep.subr.mxu0 0.0
        %1625 = vmatpush1.msra.mxu0 0.0
        %1626 = vmatprep.subr.mxu0 0.0
        %1627 = vmatpush1.msra.mxu0 0.0
        %1628 = vmatprep.subr.mxu0 0.0
        %1629 = vmatpush1.msra.mxu0 0.0
        %1630 = vmatprep.subr.mxu0 0.0
        %1631 = vmatpush1.msra.mxu0 0.0
        %1632 = vmatprep.subr.mxu0 0.0
        %1633 = vmatpush1.msra.mxu0 0.0
        %1634 = vmatprep.subr.mxu0 0.0
        %1635 = vmatpush1.msra.mxu0 0.0
        %1636 = vmatprep.subr.mxu0 0.0
        %1637 = vmatpush1.msra.mxu0 0.0
        %1638 = vmatprep.subr.mxu0 0.0
        %1639 = vmatpush1.msra.mxu0 0.0
        %1640 = vmatprep.subr.mxu0 0.0
        %1641 = vmatpush1.msra.mxu0 0.0
        %1642 = vmatprep.subr.mxu0 0.0
        %1643 = vmatpush1.msra.mxu0 0.0
        %1644 = vmatprep.subr.mxu0 0.0
        %1645 = vmatpush1.msra.mxu0 0.0
        %1646 = vmatprep.subr.mxu0 0.0
        %1647 = vmatpush1.msra.mxu0 0.0
        %1648 = vmatprep.subr.mxu0 0.0
        %1649 = vmatpush1.msra.mxu0 0.0
        %1650 = vmatprep.subr.mxu0 0.0
        %1651 = vmatpush1.msra.mxu0 0.0
        %1652 = vmatprep.subr.mxu0 0.0
        %1653 = vmatpush1.msra.mxu0 0.0
        %1654 = vmatprep.subr.mxu0 0.0
        %1655 = vmatpush1.msra.mxu0 0.0
        %1656 = vmatprep.subr.mxu0 0.0
        %1657 = vmatpush1.msra.mxu0 0.0
        %1658 = vmatprep.subr.mxu0 0.0
        %1659 = vmatpush1.msra.mxu0 0.0
        %1660 = vmatprep.subr.mxu0 0.0
        %1661 = vmatpush1.msra.mxu0 0.0
        %1662 = vmatprep.mubr.f32.mxu0 0.0
        %1663 = vmatmul.mubr.f32.gmra.mrb[0].mxu0 %v1587
        %v1664 = vpop.f32.mrb[0].mxu0
        %v1665 = vadd.f32 0.0, %v1664
        %v1666 = vpop.f32.mrb[0].mxu0
        %1667 = vmatprep.mubr.f32.mxu0 0.0
        %1668 = vmatmul.mubr.f32.gmra.mrb[0].mxu0 %v1590
        %v1669 = vpop.f32.mrb[0].mxu0
        %v1670 = vadd.f32 0.0, %v1669
        %v1671 = vpop.f32.mrb[0].mxu0
        %1672 = vmatprep.mubr.f32.mxu0 0.0
        %1673 = vmatmul.mubr.f32.gmra.mrb[0].mxu0 %v1593
        %v1674 = vpop.f32.mrb[0].mxu0
        %v1675 = vadd.f32 0.0, %v1674
        %v1676 = vpop.f32.mrb[0].mxu0
        %1677 = vmatprep.mubr.f32.mxu0 0.0
        %1678 = vmatmul.mubr.f32.gmra.mrb[0].mxu0 %v1596
        %v1679 = vpop.f32.mrb[0].mxu0
        %v1680 = vadd.f32 0.0, %v1679
        %v1681 = vpop.f32.mrb[0].mxu0
        %1682 = vdwg.mxu0
        %s1683 = scalar_lea.vmem [#allocation7], 64
        %v1684 = vld [vmem:[%s1683] sm:$0xff]
        %v1685 = vld [vmem:[%s1683 + $0x8] sm:$0xff]
        %v1686 = vld [vmem:[%s1683 + $0x10] sm:$0xff]
        %v1687 = vld [vmem:[%s1683 + $0x18] sm:$0xff]
        %v1688 = vld [vmem:[%s1683 + $0x20] sm:$0xff]
        %v1689 = vld [vmem:[%s1683 + $0x28] sm:$0xff]
        %v1690 = vld [vmem:[%s1683 + $0x30] sm:$0xff]
        %v1691 = vld [vmem:[%s1683 + $0x38] sm:$0xff]
        %1692 = vmatprep.subr.mxu0 0.0
        %1693 = vmatpush1.msra.mxu0 %v1684
        %1694 = vmatprep.subr.mxu0 0.0
        %1695 = vmatpush1.msra.mxu0 %v1685
        %1696 = vmatprep.subr.mxu0 0.0
        %1697 = vmatpush1.msra.mxu0 %v1686
        %1698 = vmatprep.subr.mxu0 0.0
        %1699 = vmatpush1.msra.mxu0 %v1687
        %1700 = vmatprep.subr.mxu0 0.0
        %1701 = vmatpush1.msra.mxu0 %v1688
        %1702 = vmatprep.subr.mxu0 0.0
        %1703 = vmatpush1.msra.mxu0 %v1689
        %1704 = vmatprep.subr.mxu0 0.0
        %1705 = vmatpush1.msra.mxu0 %v1690
        %1706 = vmatprep.subr.mxu0 0.0
        %1707 = vmatpush1.msra.mxu0 %v1691
        %1708 = vmatprep.subr.mxu0 0.0
        %1709 = vmatpush1.msra.mxu0 0.0
        %1710 = vmatprep.subr.mxu0 0.0
        %1711 = vmatpush1.msra.mxu0 0.0
        %1712 = vmatprep.subr.mxu0 0.0
        %1713 = vmatpush1.msra.mxu0 0.0
        %1714 = vmatprep.subr.mxu0 0.0
        %1715 = vmatpush1.msra.mxu0 0.0
        %1716 = vmatprep.subr.mxu0 0.0
        %1717 = vmatpush1.msra.mxu0 0.0
        %1718 = vmatprep.subr.mxu0 0.0
        %1719 = vmatpush1.msra.mxu0 0.0
        %1720 = vmatprep.subr.mxu0 0.0
        %1721 = vmatpush1.msra.mxu0 0.0
        %1722 = vmatprep.subr.mxu0 0.0
        %1723 = vmatpush1.msra.mxu0 0.0
        %1724 = vmatprep.subr.mxu0 0.0
        %1725 = vmatpush1.msra.mxu0 0.0
        %1726 = vmatprep.subr.mxu0 0.0
        %1727 = vmatpush1.msra.mxu0 0.0
        %1728 = vmatprep.subr.mxu0 0.0
        %1729 = vmatpush1.msra.mxu0 0.0
        %1730 = vmatprep.subr.mxu0 0.0
        %1731 = vmatpush1.msra.mxu0 0.0
        %1732 = vmatprep.subr.mxu0 0.0
        %1733 = vmatpush1.msra.mxu0 0.0
        %1734 = vmatprep.subr.mxu0 0.0
        %1735 = vmatpush1.msra.mxu0 0.0
        %1736 = vmatprep.subr.mxu0 0.0
        %1737 = vmatpush1.msra.mxu0 0.0
        %1738 = vmatprep.subr.mxu0 0.0
        %1739 = vmatpush1.msra.mxu0 0.0
        %1740 = vmatprep.subr.mxu0 0.0
        %1741 = vmatpush1.msra.mxu0 0.0
        %1742 = vmatprep.subr.mxu0 0.0
        %1743 = vmatpush1.msra.mxu0 0.0
        %1744 = vmatprep.subr.mxu0 0.0
        %1745 = vmatpush1.msra.mxu0 0.0
        %1746 = vmatprep.subr.mxu0 0.0
        %1747 = vmatpush1.msra.mxu0 0.0
        %1748 = vmatprep.subr.mxu0 0.0
        %1749 = vmatpush1.msra.mxu0 0.0
        %1750 = vmatprep.subr.mxu0 0.0
        %1751 = vmatpush1.msra.mxu0 0.0
        %1752 = vmatprep.subr.mxu0 0.0
        %1753 = vmatpush1.msra.mxu0 0.0
        %1754 = vmatprep.subr.mxu0 0.0
        %1755 = vmatpush1.msra.mxu0 0.0
        %1756 = vmatprep.mubr.f32.mxu0 0.0
        %1757 = vmatmul.mubr.f32.gmra.mrb[0].mxu0 %v1587
        %v1758 = vpop.f32.mrb[0].mxu0
        %v1759 = vadd.f32 0.0, %v1758
        %v1760 = vpop.f32.mrb[0].mxu0
        %1761 = vmatprep.mubr.f32.mxu0 0.0
        %1762 = vmatmul.mubr.f32.gmra.mrb[0].mxu0 %v1590
        %v1763 = vpop.f32.mrb[0].mxu0
        %v1764 = vadd.f32 0.0, %v1763
        %v1765 = vpop.f32.mrb[0].mxu0
        %1766 = vmatprep.mubr.f32.mxu0 0.0
        %1767 = vmatmul.mubr.f32.gmra.mrb[0].mxu0 %v1593
        %v1768 = vpop.f32.mrb[0].mxu0
        %v1769 = vadd.f32 0.0, %v1768
        %v1770 = vpop.f32.mrb[0].mxu0
        %1771 = vmatprep.mubr.f32.mxu0 0.0
        %1772 = vmatmul.mubr.f32.gmra.mrb[0].mxu0 %v1596
        %v1773 = vpop.f32.mrb[0].mxu0
        %v1774 = vadd.f32 0.0, %v1773
        %v1775 = vpop.f32.mrb[0].mxu0
        %1776 = vdwg.mxu0
        %1777 = vmatprep.subr.mxu0 0.0
        %1778 = vmatpush1.msra.mxu0 %v1759
        %1779 = vmatprep.subr.mxu0 0.0
        %1780 = vmatpush1.msra.mxu0 %v1764
        %1781 = vmatprep.subr.mxu0 0.0
        %1782 = vmatpush1.msra.mxu0 %v1769
        %1783 = vmatprep.subr.mxu0 0.0
        %1784 = vmatpush1.msra.mxu0 %v1774
        %1785 = vmatprep.subr.mxu0 0.0
        %1786 = vmatpush1.msra.mxu0 0.0
        %1787 = vmatprep.subr.mxu0 0.0
        %1788 = vmatpush1.msra.mxu0 0.0
        %1789 = vmatprep.subr.mxu0 0.0
        %1790 = vmatpush1.msra.mxu0 0.0
        %1791 = vmatprep.subr.mxu0 0.0
        %1792 = vmatpush1.msra.mxu0 0.0
        %1793 = vmatprep.subr.mxu0 0.0
        %1794 = vmatpush1.msra.mxu0 0.0
        %1795 = vmatprep.subr.mxu0 0.0
        %1796 = vmatpush1.msra.mxu0 0.0
        %1797 = vmatprep.subr.mxu0 0.0
        %1798 = vmatpush1.msra.mxu0 0.0
        %1799 = vmatprep.subr.mxu0 0.0
        %1800 = vmatpush1.msra.mxu0 0.0
        %1801 = vmatprep.subr.mxu0 0.0
        %1802 = vmatpush1.msra.mxu0 0.0
        %1803 = vmatprep.subr.mxu0 0.0
        %1804 = vmatpush1.msra.mxu0 0.0
        %1805 = vmatprep.subr.mxu0 0.0
        %1806 = vmatpush1.msra.mxu0 0.0
        %1807 = vmatprep.subr.mxu0 0.0
        %1808 = vmatpush1.msra.mxu0 0.0
        %1809 = vmatprep.subr.mxu0 0.0
        %1810 = vmatpush1.msra.mxu0 0.0
        %1811 = vmatprep.subr.mxu0 0.0
        %1812 = vmatpush1.msra.mxu0 0.0
        %1813 = vmatprep.subr.mxu0 0.0
        %1814 = vmatpush1.msra.mxu0 0.0
        %1815 = vmatprep.subr.mxu0 0.0
        %1816 = vmatpush1.msra.mxu0 0.0
        %1817 = vmatprep.subr.mxu0 0.0
        %1818 = vmatpush1.msra.mxu0 0.0
        %1819 = vmatprep.subr.mxu0 0.0
        %1820 = vmatpush1.msra.mxu0 0.0
        %1821 = vmatprep.subr.mxu0 0.0
        %1822 = vmatpush1.msra.mxu0 0.0
        %1823 = vmatprep.subr.mxu0 0.0
        %1824 = vmatpush1.msra.mxu0 0.0
        %1825 = vmatprep.subr.mxu0 0.0
        %1826 = vmatpush1.msra.mxu0 0.0
        %1827 = vmatprep.subr.mxu0 0.0
        %1828 = vmatpush1.msra.mxu0 0.0
        %1829 = vmatprep.subr.mxu0 0.0
        %1830 = vmatpush1.msra.mxu0 0.0
        %1831 = vmatprep.subr.mxu0 0.0
        %1832 = vmatpush1.msra.mxu0 0.0
        %1833 = vmatprep.subr.mxu0 0.0
        %1834 = vmatpush1.msra.mxu0 0.0
        %1835 = vmatprep.subr.mxu0 0.0
        %1836 = vmatpush1.msra.mxu0 0.0
        %1837 = vmatprep.subr.mxu0 0.0
        %1838 = vmatpush1.msra.mxu0 0.0
        %1839 = vmatprep.subr.mxu0 0.0
        %1840 = vmatpush1.msra.mxu0 0.0
        %1841 = vmatprep.mubr.f32.mxu0 0.0
        %1842 = vmatmul.mubr.f32.gmra.mrb[0].mxu0 %v1170
        %v1843 = vpop.f32.mrb[0].mxu0
        %v1844 = vadd.f32 0.0, %v1843
        %v1845 = vpop.f32.mrb[0].mxu0
        %1846 = vmatprep.mubr.f32.mxu0 0.0
        %1847 = vmatmul.mubr.f32.gmra.mrb[0].mxu0 %v1173
        %v1848 = vpop.f32.mrb[0].mxu0
        %v1849 = vadd.f32 0.0, %v1848
        %v1850 = vpop.f32.mrb[0].mxu0
        %1851 = vmatprep.mubr.f32.mxu0 0.0
        %1852 = vmatmul.mubr.f32.gmra.mrb[0].mxu0 %v1176
        %v1853 = vpop.f32.mrb[0].mxu0
        %v1854 = vadd.f32 0.0, %v1853
        %v1855 = vpop.f32.mrb[0].mxu0
        %1856 = vmatprep.mubr.f32.mxu0 0.0
        %1857 = vmatmul.mubr.f32.gmra.mrb[0].mxu0 %v1179
        %v1858 = vpop.f32.mrb[0].mxu0
        %v1859 = vadd.f32 0.0, %v1858
        %v1860 = vpop.f32.mrb[0].mxu0
        %1861 = vdwg.mxu0
        %1862 = vmatprep.subr.mxu0 0.0
        %1863 = vmatpush1.msra.mxu0 %v1665
        %1864 = vmatprep.subr.mxu0 0.0
        %1865 = vmatpush1.msra.mxu0 %v1670
        %1866 = vmatprep.subr.mxu0 0.0
        %1867 = vmatpush1.msra.mxu0 %v1675
        %1868 = vmatprep.subr.mxu0 0.0
        %1869 = vmatpush1.msra.mxu0 %v1680
        %1870 = vmatprep.subr.mxu0 0.0
        %1871 = vmatpush1.msra.mxu0 0.0
        %1872 = vmatprep.subr.mxu0 0.0
        %1873 = vmatpush1.msra.mxu0 0.0
        %1874 = vmatprep.subr.mxu0 0.0
        %1875 = vmatpush1.msra.mxu0 0.0
        %1876 = vmatprep.subr.mxu0 0.0
        %1877 = vmatpush1.msra.mxu0 0.0
        %1878 = vmatprep.subr.mxu0 0.0
        %1879 = vmatpush1.msra.mxu0 0.0
        %1880 = vmatprep.subr.mxu0 0.0
        %1881 = vmatpush1.msra.mxu0 0.0
        %1882 = vmatprep.subr.mxu0 0.0
        %1883 = vmatpush1.msra.mxu0 0.0
        %1884 = vmatprep.subr.mxu0 0.0
        %1885 = vmatpush1.msra.mxu0 0.0
        %1886 = vmatprep.subr.mxu0 0.0
        %1887 = vmatpush1.msra.mxu0 0.0
        %1888 = vmatprep.subr.mxu0 0.0
        %1889 = vmatpush1.msra.mxu0 0.0
        %1890 = vmatprep.subr.mxu0 0.0
        %1891 = vmatpush1.msra.mxu0 0.0
        %1892 = vmatprep.subr.mxu0 0.0
        %1893 = vmatpush1.msra.mxu0 0.0
        %1894 = vmatprep.subr.mxu0 0.0
        %1895 = vmatpush1.msra.mxu0 0.0
        %1896 = vmatprep.subr.mxu0 0.0
        %1897 = vmatpush1.msra.mxu0 0.0
        %1898 = vmatprep.subr.mxu0 0.0
        %1899 = vmatpush1.msra.mxu0 0.0
        %1900 = vmatprep.subr.mxu0 0.0
        %1901 = vmatpush1.msra.mxu0 0.0
        %1902 = vmatprep.subr.mxu0 0.0
        %1903 = vmatpush1.msra.mxu0 0.0
        %1904 = vmatprep.subr.mxu0 0.0
        %1905 = vmatpush1.msra.mxu0 0.0
        %1906 = vmatprep.subr.mxu0 0.0
        %1907 = vmatpush1.msra.mxu0 0.0
        %1908 = vmatprep.subr.mxu0 0.0
        %1909 = vmatpush1.msra.mxu0 0.0
        %1910 = vmatprep.subr.mxu0 0.0
        %1911 = vmatpush1.msra.mxu0 0.0
        %1912 = vmatprep.subr.mxu0 0.0
        %1913 = vmatpush1.msra.mxu0 0.0
        %1914 = vmatprep.subr.mxu0 0.0
        %1915 = vmatpush1.msra.mxu0 0.0
        %1916 = vmatprep.subr.mxu0 0.0
        %1917 = vmatpush1.msra.mxu0 0.0
        %1918 = vmatprep.subr.mxu0 0.0
        %1919 = vmatpush1.msra.mxu0 0.0
        %1920 = vmatprep.subr.mxu0 0.0
        %1921 = vmatpush1.msra.mxu0 0.0
        %1922 = vmatprep.subr.mxu0 0.0
        %1923 = vmatpush1.msra.mxu0 0.0
        %1924 = vmatprep.subr.mxu0 0.0
        %1925 = vmatpush1.msra.mxu0 0.0
        %1926 = vmatprep.mubr.f32.mxu0 0.0
        %1927 = vmatmul.mubr.f32.gmra.mrb[0].mxu0 %v1267
        %v1928 = vpop.f32.mrb[0].mxu0
        %v1929 = vadd.f32 %v1844, %v1928
        %v1930 = vpop.f32.mrb[0].mxu0
        %1931 = vmatprep.mubr.f32.mxu0 0.0
        %1932 = vmatmul.mubr.f32.gmra.mrb[0].mxu0 %v1270
        %v1933 = vpop.f32.mrb[0].mxu0
        %v1934 = vadd.f32 %v1849, %v1933
        %v1935 = vpop.f32.mrb[0].mxu0
        %1936 = vmatprep.mubr.f32.mxu0 0.0
        %1937 = vmatmul.mubr.f32.gmra.mrb[0].mxu0 %v1273
        %v1938 = vpop.f32.mrb[0].mxu0
        %v1939 = vadd.f32 %v1854, %v1938
        %v1940 = vpop.f32.mrb[0].mxu0
        %1941 = vmatprep.mubr.f32.mxu0 0.0
        %1942 = vmatmul.mubr.f32.gmra.mrb[0].mxu0 %v1276
        %v1943 = vpop.f32.mrb[0].mxu0
        %v1944 = vadd.f32 %v1859, %v1943
        %v1945 = vpop.f32.mrb[0].mxu0
        %1946 = vdwg.mxu0
        %s1947 = scalar_lea.vmem [#allocation7], 128
        %v1948 = vld [vmem:[%s1947] sm:$0xff]
        %v1949 = vld [vmem:[%s1947 + $0x8] sm:$0xff]
        %v1950 = vld [vmem:[%s1947 + $0x10] sm:$0xff]
        %v1951 = vld [vmem:[%s1947 + $0x18] sm:$0xff]
        %v1952 = vld [vmem:[%s1947 + $0x20] sm:$0xff]
        %v1953 = vld [vmem:[%s1947 + $0x28] sm:$0xff]
        %v1954 = vld [vmem:[%s1947 + $0x30] sm:$0xff]
        %v1955 = vld [vmem:[%s1947 + $0x38] sm:$0xff]
        %1956 = vmatprep.subr.mxu0 0.0
        %1957 = vmatpush1.msra.mxu0 %v1948
        %1958 = vmatprep.subr.mxu0 0.0
        %1959 = vmatpush1.msra.mxu0 %v1949
        %1960 = vmatprep.subr.mxu0 0.0
        %1961 = vmatpush1.msra.mxu0 %v1950
        %1962 = vmatprep.subr.mxu0 0.0
        %1963 = vmatpush1.msra.mxu0 %v1951
        %1964 = vmatprep.subr.mxu0 0.0
        %1965 = vmatpush1.msra.mxu0 %v1952
        %1966 = vmatprep.subr.mxu0 0.0
        %1967 = vmatpush1.msra.mxu0 %v1953
        %1968 = vmatprep.subr.mxu0 0.0
        %1969 = vmatpush1.msra.mxu0 %v1954
        %1970 = vmatprep.subr.mxu0 0.0
        %1971 = vmatpush1.msra.mxu0 %v1955
        %1972 = vmatprep.subr.mxu0 0.0
        %1973 = vmatpush1.msra.mxu0 0.0
        %1974 = vmatprep.subr.mxu0 0.0
        %1975 = vmatpush1.msra.mxu0 0.0
        %1976 = vmatprep.subr.mxu0 0.0
        %1977 = vmatpush1.msra.mxu0 0.0
        %1978 = vmatprep.subr.mxu0 0.0
        %1979 = vmatpush1.msra.mxu0 0.0
        %1980 = vmatprep.subr.mxu0 0.0
        %1981 = vmatpush1.msra.mxu0 0.0
        %1982 = vmatprep.subr.mxu0 0.0
        %1983 = vmatpush1.msra.mxu0 0.0
        %1984 = vmatprep.subr.mxu0 0.0
        %1985 = vmatpush1.msra.mxu0 0.0
        %1986 = vmatprep.subr.mxu0 0.0
        %1987 = vmatpush1.msra.mxu0 0.0
        %1988 = vmatprep.subr.mxu0 0.0
        %1989 = vmatpush1.msra.mxu0 0.0
        %1990 = vmatprep.subr.mxu0 0.0
        %1991 = vmatpush1.msra.mxu0 0.0
        %1992 = vmatprep.subr.mxu0 0.0
        %1993 = vmatpush1.msra.mxu0 0.0
        %1994 = vmatprep.subr.mxu0 0.0
        %1995 = vmatpush1.msra.mxu0 0.0
        %1996 = vmatprep.subr.mxu0 0.0
        %1997 = vmatpush1.msra.mxu0 0.0
        %1998 = vmatprep.subr.mxu0 0.0
        %1999 = vmatpush1.msra.mxu0 0.0
        %2000 = vmatprep.subr.mxu0 0.0
        %2001 = vmatpush1.msra.mxu0 0.0
        %2002 = vmatprep.subr.mxu0 0.0
        %2003 = vmatpush1.msra.mxu0 0.0
        %2004 = vmatprep.subr.mxu0 0.0
        %2005 = vmatpush1.msra.mxu0 0.0
        %2006 = vmatprep.subr.mxu0 0.0
        %2007 = vmatpush1.msra.mxu0 0.0
        %2008 = vmatprep.subr.mxu0 0.0
        %2009 = vmatpush1.msra.mxu0 0.0
        %2010 = vmatprep.subr.mxu0 0.0
        %2011 = vmatpush1.msra.mxu0 0.0
        %2012 = vmatprep.subr.mxu0 0.0
        %2013 = vmatpush1.msra.mxu0 0.0
        %2014 = vmatprep.subr.mxu0 0.0
        %2015 = vmatpush1.msra.mxu0 0.0
        %2016 = vmatprep.subr.mxu0 0.0
        %2017 = vmatpush1.msra.mxu0 0.0
        %2018 = vmatprep.subr.mxu0 0.0
        %2019 = vmatpush1.msra.mxu0 0.0
        %2020 = vmatprep.mubr.f32.mxu0 0.0
        %2021 = vmatmul.mubr.f32.gmra.mrb[0].mxu0 %v1587
        %v2022 = vpop.f32.mrb[0].mxu0
        %v2023 = vadd.f32 0.0, %v2022
        %v2024 = vpop.f32.mrb[0].mxu0
        %2025 = vmatprep.mubr.f32.mxu0 0.0
        %2026 = vmatmul.mubr.f32.gmra.mrb[0].mxu0 %v1590
        %v2027 = vpop.f32.mrb[0].mxu0
        %v2028 = vadd.f32 0.0, %v2027
        %v2029 = vpop.f32.mrb[0].mxu0
        %2030 = vmatprep.mubr.f32.mxu0 0.0
        %2031 = vmatmul.mubr.f32.gmra.mrb[0].mxu0 %v1593
        %v2032 = vpop.f32.mrb[0].mxu0
        %v2033 = vadd.f32 0.0, %v2032
        %v2034 = vpop.f32.mrb[0].mxu0
        %2035 = vmatprep.mubr.f32.mxu0 0.0
        %2036 = vmatmul.mubr.f32.gmra.mrb[0].mxu0 %v1596
        %v2037 = vpop.f32.mrb[0].mxu0
        %v2038 = vadd.f32 0.0, %v2037
        %v2039 = vpop.f32.mrb[0].mxu0
        %2040 = vdwg.mxu0
        %2041 = vmatprep.subr.mxu0 0.0
        %2042 = vmatpush1.msra.mxu0 %v2023
        %2043 = vmatprep.subr.mxu0 0.0
        %2044 = vmatpush1.msra.mxu0 %v2028
        %2045 = vmatprep.subr.mxu0 0.0
        %2046 = vmatpush1.msra.mxu0 %v2033
        %2047 = vmatprep.subr.mxu0 0.0
        %2048 = vmatpush1.msra.mxu0 %v2038
        %2049 = vmatprep.subr.mxu0 0.0
        %2050 = vmatpush1.msra.mxu0 0.0
        %2051 = vmatprep.subr.mxu0 0.0
        %2052 = vmatpush1.msra.mxu0 0.0
        %2053 = vmatprep.subr.mxu0 0.0
        %2054 = vmatpush1.msra.mxu0 0.0
        %2055 = vmatprep.subr.mxu0 0.0
        %2056 = vmatpush1.msra.mxu0 0.0
        %2057 = vmatprep.subr.mxu0 0.0
        %2058 = vmatpush1.msra.mxu0 0.0
        %2059 = vmatprep.subr.mxu0 0.0
        %2060 = vmatpush1.msra.mxu0 0.0
        %2061 = vmatprep.subr.mxu0 0.0
        %2062 = vmatpush1.msra.mxu0 0.0
        %2063 = vmatprep.subr.mxu0 0.0
        %2064 = vmatpush1.msra.mxu0 0.0
        %2065 = vmatprep.subr.mxu0 0.0
        %2066 = vmatpush1.msra.mxu0 0.0
        %2067 = vmatprep.subr.mxu0 0.0
        %2068 = vmatpush1.msra.mxu0 0.0
        %2069 = vmatprep.subr.mxu0 0.0
        %2070 = vmatpush1.msra.mxu0 0.0
        %2071 = vmatprep.subr.mxu0 0.0
        %2072 = vmatpush1.msra.mxu0 0.0
        %2073 = vmatprep.subr.mxu0 0.0
        %2074 = vmatpush1.msra.mxu0 0.0
        %2075 = vmatprep.subr.mxu0 0.0
        %2076 = vmatpush1.msra.mxu0 0.0
        %2077 = vmatprep.subr.mxu0 0.0
        %2078 = vmatpush1.msra.mxu0 0.0
        %2079 = vmatprep.subr.mxu0 0.0
        %2080 = vmatpush1.msra.mxu0 0.0
        %2081 = vmatprep.subr.mxu0 0.0
        %2082 = vmatpush1.msra.mxu0 0.0
        %2083 = vmatprep.subr.mxu0 0.0
        %2084 = vmatpush1.msra.mxu0 0.0
        %2085 = vmatprep.subr.mxu0 0.0
        %2086 = vmatpush1.msra.mxu0 0.0
        %2087 = vmatprep.subr.mxu0 0.0
        %2088 = vmatpush1.msra.mxu0 0.0
        %2089 = vmatprep.subr.mxu0 0.0
        %2090 = vmatpush1.msra.mxu0 0.0
        %2091 = vmatprep.subr.mxu0 0.0
        %2092 = vmatpush1.msra.mxu0 0.0
        %2093 = vmatprep.subr.mxu0 0.0
        %2094 = vmatpush1.msra.mxu0 0.0
        %2095 = vmatprep.subr.mxu0 0.0
        %2096 = vmatpush1.msra.mxu0 0.0
        %2097 = vmatprep.subr.mxu0 0.0
        %2098 = vmatpush1.msra.mxu0 0.0
        %2099 = vmatprep.subr.mxu0 0.0
        %2100 = vmatpush1.msra.mxu0 0.0
        %2101 = vmatprep.subr.mxu0 0.0
        %2102 = vmatpush1.msra.mxu0 0.0
        %2103 = vmatprep.subr.mxu0 0.0
        %2104 = vmatpush1.msra.mxu0 0.0
        %2105 = vmatprep.mubr.f32.mxu0 0.0
        %2106 = vmatmul.mubr.f32.gmra.mrb[0].mxu0 %v1463
        %v2107 = vpop.f32.mrb[0].mxu0
        %v2108 = vadd.f32 0.0, %v2107
        %v2109 = vpop.f32.mrb[0].mxu0
        %2110 = vmatprep.mubr.f32.mxu0 0.0
        %2111 = vmatmul.mubr.f32.gmra.mrb[0].mxu0 %v1466
        %v2112 = vpop.f32.mrb[0].mxu0
        %v2113 = vadd.f32 0.0, %v2112
        %v2114 = vpop.f32.mrb[0].mxu0
        %2115 = vmatprep.mubr.f32.mxu0 0.0
        %2116 = vmatmul.mubr.f32.gmra.mrb[0].mxu0 %v1469
        %v2117 = vpop.f32.mrb[0].mxu0
        %v2118 = vadd.f32 0.0, %v2117
        %v2119 = vpop.f32.mrb[0].mxu0
        %2120 = vmatprep.mubr.f32.mxu0 0.0
        %2121 = vmatmul.mubr.f32.gmra.mrb[0].mxu0 %v1472
        %v2122 = vpop.f32.mrb[0].mxu0
        %v2123 = vadd.f32 0.0, %v2122
        %v2124 = vpop.f32.mrb[0].mxu0
        %2125 = vdwg.mxu0
        %v2126 = vadd.f32 %v1929, %v2108
        %v2127 = vadd.f32 %v1934, %v2113
        %v2128 = vadd.f32 %v1939, %v2118
        %v2129 = vadd.f32 %v1944, %v2123
        %v2130 = vld [vmem:[%s8] sm:$0x1]
        %v2132 = vlaneseq
        %v2133 = vshrl.u32 %v2132, 7
        %v2134 = vsub.s32 0, %v2133
        %v2135 = vrot.slane %v2130, %v2134
        %v2137 = vadd.f32 %v2126, %v2135
        %v2138 = vadd.f32 %v2127, %v2135
        %v2139 = vadd.f32 %v2128, %v2135
        %v2140 = vadd.f32 %v2129, %v2135
        %v2141 = vmax.f32 %v2137, 0.0
        %v2142 = vmax.f32 %v2138, 0.0
        %v2143 = vmax.f32 %v2139, 0.0
        %v2144 = vmax.f32 %v2140, 0.0
        %2145 = vst [vmem:[%s369] sm:$0xff] %v2141
        %2146 = vst [vmem:[%s369 + $0x8] sm:$0xff] %v2142
        %2147 = vst [vmem:[%s369 + $0x10] sm:$0xff] %v2143
        %2148 = vst [vmem:[%s369 + $0x18] sm:$0xff] %v2144
        %s2149 = sand.u32 %s227, 1
        %s2150 = scalar_lea.sflag [#allocation4], %s2149
        %s2151 = sand.u32 %s227, 1
        %s2152 = smul.addr %s2151, 32
        %s2153 = scalar_lea.vmem [#allocation8], %s2152
        // Predicated region
        $region69: #{tpu_custom_call.1} parent=55 // pred_check
          %p2154 = pneg %p237
        $region70: #{tpu_custom_call.1} parent=55 // pred_check_branch
          %2156 = sbr.rel (%p2154) target = $region72
        $region71: #{tpu_custom_call.1} parent=55 // pred_region
          %s2158 = ssub.s32 512, 512
          %2159 = vsyncadd %s2150, %s2158
          %s2160 = smul.addr %s25, 4
          %s2161 = smul.addr %s2160, 128
          %s2162 = scalar_lea.hbm %s9, %s2161
          %s2163 = sshll.u32 %s2153, 4
          %s2164 = int_to_ptr.vmem [resolvable:$true] %s2163
          %2169 = dma.vmem_to_hbm [thread:$0]  %s2164, 512, %s2162, %s2150, 128, 128, 8
        $region72: #{tpu_custom_call.1} parent=55 // pred_fallthru
          _
      $region56: #{tpu_custom_call.1} parent=5 // pred_fallthru
        _
      %p2170 = scmp.le.s32.totalorder 2, %s20
      // Predicated region
      $region73: #{tpu_custom_call.1} parent=5 // pred_check
        %p2171 = pneg %p2170
      $region74: #{tpu_custom_call.1} parent=5 // pred_check_branch
        %2173 = sbr.rel (%p2171) target = $region76
      $region75: #{tpu_custom_call.1} parent=5 // pred_region
        %s2174 = ssub.s32 %s20, 2
        // Predicated region
        $region77: #{tpu_custom_call.1} parent=75 // pred_check
          %p2175 = pneg %p243
        $region78: #{tpu_custom_call.1} parent=75 // pred_check_branch
          %2177 = sbr.rel (%p2175) target = $region80
        $region79: #{tpu_custom_call.1} parent=75 // pred_region
          %s2178 = sand.u32 %s228, 1
          %s2179 = scalar_lea.sflag [#allocation4], %s2178
          %s2180 = sand.u32 %s228, 1
          %s2181 = smul.addr %s2180, 32
          %s2182 = scalar_lea.vmem [#allocation8], %s2181
          %2183 = dma.done %s2179, 512
        $region80: #{tpu_custom_call.1} parent=75 // pred_fallthru
          _
      $region76: #{tpu_custom_call.1} parent=5 // pred_fallthru
        _
    $region6: #{tpu_custom_call.1} parent=1 // loop_footer
      %s24 = sadd.s32 1, %s20
    $region7: #{tpu_custom_call.1} parent=1 // loop_footer_branch
      %19 = sbr.rel target = $region3
    $region8: #{tpu_custom_call.1} parent=1 // loop_exit
      _
    %2184 = vsyncpa [#allocation3], 1
    %s2185 = scalar_lea.sflag [#allocation3], 1
    %2186 = vsyncpa %s2185, 1
    %2187 = vsyncpa [#allocation6], 1
    %2188 = vsyncpa [#allocation4], 1
    %s2189 = scalar_lea.sflag [#allocation4], 1
    %2190 = vsyncpa %s2189, 1

</llo_original>
